<compile_context>
chip_gen: v5e
topology: v5e:2x2
jax: 0.10.0
libtpu: 0.0.40
codegen_flags: <defaults>
</compile_context>

<pallas_src>
import numpy as np
import jax
import jax.numpy as jnp
from jax.experimental import pallas as pl
from jax.experimental.pallas import tpu as pltpu

# ----- Module defaults (LogMel.__init__) -----
WIN_LENGTH = 400
HOP_LENGTH = 160
N_FFT = 400
N_MELS = 40
SAMPLE_RATE = 16000
N_FREQ = N_FFT // 2 + 1          # 201 onesided rfft bins

# ----- TPU-friendly padded dims -----
K_DFT = 3 * HOP_LENGTH           # 480: frame stitched from 3 hop-chunks
NFREQ_PAD = 256                  # 201 -> 256 (freq bins, lane padded)
NMELS_PAD = 128                  # 40  -> 128 (mel bins, lane padded)
NSPEC_PAD = 2 * NFREQ_PAD        # fused [real | imag] width = 512
TAIL_ROWS = 8                    # extra chunk rows fetched for frame overlap


# ------------------- deterministic parameter construction -------------------
def _hz_to_mel(f):
    return 2595.0 * np.log10(1.0 + f / 700.0)


def _mel_to_hz(m):
    return 700.0 * (10.0 ** (m / 2595.0) - 1.0)


def make_mel_fb(n_freqs, n_mels, sample_rate, f_min=0.0, f_max=None):
    """torchaudio.functional.melscale_fbanks (mel_scale='htk', norm=None)."""
    if f_max is None:
        f_max = sample_rate / 2.0
    all_freqs = np.linspace(0.0, sample_rate / 2.0, n_freqs)
    m_pts = np.linspace(_hz_to_mel(f_min), _hz_to_mel(f_max), n_mels + 2)
    f_pts = _mel_to_hz(m_pts)
    f_diff = f_pts[1:] - f_pts[:-1]
    slopes = f_pts[None, :] - all_freqs[:, None]
    down = -slopes[:, :-2] / f_diff[:-1]
    up = slopes[:, 2:] / f_diff[1:]
    return np.maximum(0.0, np.minimum(down, up))       # (n_freqs, n_mels)


def make_hann(win_length):
    """torch.hann_window(win_length, periodic=True)."""
    n = np.arange(win_length).astype(np.float64)
    return 0.5 - 0.5 * np.cos(2.0 * np.pi * n / win_length)


def _split_hi_lo(w_np):
    """Split f32 weights into bf16 hi/lo parts (hi + lo ~ f32)."""
    w = jnp.asarray(w_np, jnp.float32)
    hi = w.astype(jnp.bfloat16)
    lo = (w - hi.astype(jnp.float32)).astype(jnp.bfloat16)
    return hi, lo


def make_weights():
    """Windowed fused DFT basis (480, 512) + fused mel filterbank (256, 256)."""
    win = make_hann(WIN_LENGTH)                                  # (400,)
    n = np.arange(N_FFT)[:, None].astype(np.float64)
    f = np.arange(N_FREQ)[None, :].astype(np.float64)
    ang = 2.0 * np.pi * n * f / float(N_FFT)
    # Window folded into the basis: (x * w) @ C == x @ (w[:,None] * C).
    # Rows 400..479 stay exactly zero -> stitched tail samples never count.
    basis = np.zeros((K_DFT, NSPEC_PAD), np.float64)
    basis[:N_FFT, :N_FREQ] = win[:, None] * np.cos(ang)          # real part
    basis[:N_FFT, NFREQ_PAD:NFREQ_PAD + N_FREQ] = win[:, None] * -np.sin(ang)

    fb = make_mel_fb(N_FREQ, N_MELS, SAMPLE_RATE)                # (201, 40)
    mel = np.zeros((NFREQ_PAD, NMELS_PAD), np.float64)
    mel[:N_FREQ, :N_MELS] = fb

    basis_hi, basis_lo = _split_hi_lo(basis)
    mel_hi, mel_lo = _split_hi_lo(mel)
    mel_fused = jnp.concatenate([mel_hi, mel_lo], axis=1)        # (256, 256)
    return basis_hi, basis_lo, mel_fused


# ------------------------------- Pallas kernel -------------------------------
def logmel_kernel(main_ref, tail_ref, basis_hi_ref, basis_lo_ref, mel_ref,
                  out_ref, comb_ref):
    tm = out_ref.shape[0]

    # ---- In-kernel STFT framing --------------------------------------------
    # comb = the tm + 2 hop-chunks this tile's frames overlap; rows tm..tm+7
    # are the first rows of the NEXT tile's main block (2nd BlockSpec).
    comb_ref[0:tm, :] = main_ref[...]
    comb_ref[tm:tm + TAIL_ROWS, :] = tail_ref[...]
    # frame r = audio[r*hop : r*hop + 400] lives in chunk rows r, r+1, r+2;
    # columns 400..479 pick up samples past the window but hit zero basis rows.
    fr = jnp.concatenate(
        [comb_ref[0:tm, :], comb_ref[1:tm + 1, :], comb_ref[2:tm + 2, :]],
        axis=1)                                                  # (tm, 480) f32

    # ---- Windowed DFT: ~f32 accuracy from 3 single-pass bf16 MXU matmuls ----
    # TODO(synk): verify in the bundle dump that the 3 dots accumulate inside
    # the MXU result path (single drain); if not, switch to a K-concatenated
    # single matmul ([fr_hi | fr_lo | fr_hi] @ stacked basis).
    fr_hi = fr.astype(jnp.bfloat16)
    fr_lo = (fr - fr_hi.astype(jnp.float32)).astype(jnp.bfloat16)
    spec = jnp.dot(fr_hi, basis_hi_ref[...], preferred_element_type=jnp.float32)
    spec += jnp.dot(fr_hi, basis_lo_ref[...], preferred_element_type=jnp.float32)
    spec += jnp.dot(fr_lo, basis_hi_ref[...], preferred_element_type=jnp.float32)

    real = spec[:, :NFREQ_PAD]                                   # lane-aligned
    imag = spec[:, NFREQ_PAD:]
    power = real * real + imag * imag                            # |X|^2, (tm,256)

    # ---- Mel projection: hi part against fused [mel_hi | mel_lo] (full MXU
    # width), plus the power_lo x mel_hi correction (half width). ------------
    p_hi = power.astype(jnp.bfloat16)
    p_lo = (power - p_hi.astype(jnp.float32)).astype(jnp.bfloat16)
    both = jnp.dot(p_hi, mel_ref[...], preferred_element_type=jnp.float32)
    mel = both[:, :NMELS_PAD] + both[:, NMELS_PAD:]
    mel += jnp.dot(p_lo, mel_ref[:, :NMELS_PAD],
                   preferred_element_type=jnp.float32)

    out_ref[...] = jnp.log10(mel + 1e-6)                         # LogMel.forward


# --------------------------------- wrapper -----------------------------------
def _num_tensorcores():
    """2 for v7x / megacore devices, 1 for single-TensorCore v5e / v6e."""
    try:
        kind = jax.devices()[0].device_kind.lower()
    except Exception:
        return 2
    if "lite" in kind or "v5e" in kind or "v6e" in kind:
        return 1
    return 2


def _row_tile(n_frames, batch):
    """Frame rows per grid step: largest tile (<=512), chip-aware split."""
    max_tm = 512                       # ~8-10 MiB VMEM incl. double buffers
    if n_frames >= max_tm:
        return max_tm
    # Only force extra grid steps when there are 2 TensorCores to feed.
    steps = max(1, -(-_num_tensorcores() // max(batch, 1)))
    tm = -(-n_frames // steps)
    return min(max(8, -(-tm // 8) * 8), max_tm)


def logmel(x, basis_hi, basis_lo, mel_fused):
    """x: (B, T) float32 -> (B, n_mels, n_frames) float32 (center=True)."""
    B, T = x.shape
    n_frames = 1 + T // HOP_LENGTH          # torch stft, center=True only
    pad = N_FFT // 2

    tm = _row_tile(n_frames, B)
    n_tiles = pl.cdiv(n_frames, tm)
    rows_pad = n_tiles * tm
    n_chunks = rows_pad + TAIL_ROWS         # room for the last tile's tail

    # Host glue is audio-sized only: reflect pad (center=True), zero pad to the
    # chunk grid (zeros only ever hit zero basis rows / sliced-off frame rows),
    # and a free reshape into non-overlapping hop-sized chunks.
    xp = jnp.pad(x, ((0, 0), (pad, pad)), mode="reflect")
    xp = jnp.pad(xp, ((0, 0), (0, n_chunks * HOP_LENGTH - xp.shape[1])))
    chunks = xp.reshape(B, n_chunks, HOP_LENGTH)

    out = pl.pallas_call(
        logmel_kernel,
        out_shape=jax.ShapeDtypeStruct((B, rows_pad, NMELS_PAD), jnp.float32),
        grid=(B, n_tiles),
        in_specs=[
            # main: chunk rows whose indices equal this tile's frame indices
            pl.BlockSpec((None, tm, HOP_LENGTH), lambda b, j: (b, j, 0)),
            # tail: first 8 chunk rows of the next tile (frame overlap = 2 rows)
            pl.BlockSpec((None, TAIL_ROWS, HOP_LENGTH),
                         lambda b, j: (b, (j + 1) * (tm // TAIL_ROWS), 0)),
            # constant weights (index map (0,0)).
            # TODO(synk): single-buffer these (pipeline_mode=pl.Buffered(1))
            # once verified on-device; saves ~0.8 MiB VMEM.
            pl.BlockSpec((K_DFT, NSPEC_PAD), lambda b, j: (0, 0)),
            pl.BlockSpec((K_DFT, NSPEC_PAD), lambda b, j: (0, 0)),
            pl.BlockSpec((NFREQ_PAD, 2 * NMELS_PAD), lambda b, j: (0, 0)),
        ],
        out_specs=pl.BlockSpec((None, tm, NMELS_PAD), lambda b, j: (b, j, 0)),
        scratch_shapes=[pltpu.VMEM((tm + TAIL_ROWS, HOP_LENGTH), jnp.float32)],
        compiler_params=pltpu.CompilerParams(
            dimension_semantics=("parallel", "parallel"),
            vmem_limit_bytes=40 * 1024 * 1024),
    )(chunks, chunks, basis_hi, basis_lo, mel_fused)

    out = out[:, :n_frames, :N_MELS]
    return jnp.transpose(out, (0, 2, 1))         # (B, n_mels, n_frames)


# ----------------------------- numpy reference -------------------------------
def logmel_ref(x_np):
    x64 = x_np.astype(np.float64)
    B, T = x64.shape
    n_frames = 1 + T // HOP_LENGTH
    pad = N_FFT // 2
    xp = np.pad(x64, ((0, 0), (pad, pad)), mode="reflect")
    idx = np.arange(n_frames)[:, None] * HOP_LENGTH + np.arange(N_FFT)[None, :]
    frames = xp[:, idx] * make_hann(WIN_LENGTH)[None, None, :]
    spec = np.fft.rfft(frames, n=N_FFT, axis=-1)
    power = np.abs(spec) ** 2
    fb = make_mel_fb(N_FREQ, N_MELS, SAMPLE_RATE)
    mel = power @ fb
    out = np.log10(mel + 1e-6)
    return np.transpose(out, (0, 2, 1)).astype(np.float32)


# ----------------------------------- main -------------------------------------
if __name__ == "__main__":
    key = jax.random.PRNGKey(0)
    B, T = 2, 1600                     # 1600 samples -> 11 STFT frames
    x = jax.random.normal(key, (B, T), dtype=jnp.float32)

    weights = make_weights()           # fused windowed DFT basis + mel fb
    fn = jax.jit(logmel)
    out = jax.block_until_ready(fn(x, *weights))

    ref = logmel_ref(np.asarray(x))
    assert out.shape == (B, N_MELS, 1 + T // HOP_LENGTH), out.shape
    np.testing.assert_allclose(np.asarray(out), ref, rtol=1e-3, atol=1e-3)

    print("KERNEL_OK")
</pallas_src>

<mosaic_0001>
module attributes {stable_mosaic.version = 11 : i64} {
  func.func @logmel_kernel(%arg0: i32, %arg1: i32, %arg2: memref<1x16x160xf32, #tpu.memory_space<vmem>>, %arg3: memref<1x8x160xf32, #tpu.memory_space<vmem>>, %arg4: memref<480x512xbf16, #tpu.memory_space<vmem>>, %arg5: memref<480x512xbf16, #tpu.memory_space<vmem>>, %arg6: memref<256x256xbf16, #tpu.memory_space<vmem>>, %arg7: memref<1x16x128xf32, #tpu.memory_space<vmem>>, %arg8: memref<24x160xf32, #tpu.memory_space<vmem>>) attributes {dimension_semantics = [#tpu.dimension_semantics<parallel>, #tpu.dimension_semantics<parallel>], iteration_bounds = array<i64: 2, 1>, scalar_prefetch = 0 : i64, scratch_operands = 1 : i64, tpu.core_type = #tpu.core_type<tc>, window_params = [{transform_indices = @transform_0, window_bounds = array<i64: 1, 16, 160>}, {transform_indices = @transform_1, window_bounds = array<i64: 1, 8, 160>}, {pipeline_mode = #tpu.pipeline_mode<synchronous>, transform_indices = @transform_2, window_bounds = array<i64: 480, 512>}, {pipeline_mode = #tpu.pipeline_mode<synchronous>, transform_indices = @transform_3, window_bounds = array<i64: 480, 512>}, {pipeline_mode = #tpu.pipeline_mode<synchronous>, transform_indices = @transform_4, window_bounds = array<i64: 256, 256>}, {transform_indices = @transform_5, window_bounds = array<i64: 1, 16, 128>}]} {
    %c0 = arith.constant 0 : index
    %c0_0 = arith.constant 0 : index
    %c0_1 = arith.constant 0 : index
    %0 = vector.load %arg2[%c0, %c0_0, %c0_1] : memref<1x16x160xf32, #tpu.memory_space<vmem>>, vector<1x16x160xf32>
    %1 = vector.shape_cast %0 : vector<1x16x160xf32> to vector<16x160xf32>
    %c0_2 = arith.constant 0 : index
    %c0_3 = arith.constant 0 : index
    %2 = vector.load %arg8[%c0_2, %c0_3] : memref<24x160xf32, #tpu.memory_space<vmem>>, vector<16x160xf32>
    tpu.vector_store %arg8[%c0_2, %c0_3], %1 {strides = array<i32>} : memref<24x160xf32, #tpu.memory_space<vmem>>, vector<16x160xf32>,
    %c0_4 = arith.constant 0 : index
    %c0_5 = arith.constant 0 : index
    %c0_6 = arith.constant 0 : index
    %3 = vector.load %arg3[%c0_4, %c0_5, %c0_6] : memref<1x8x160xf32, #tpu.memory_space<vmem>>, vector<1x8x160xf32>
    %4 = vector.shape_cast %3 : vector<1x8x160xf32> to vector<8x160xf32>
    %c16 = arith.constant 16 : index
    %c0_7 = arith.constant 0 : index
    %5 = vector.load %arg8[%c16, %c0_7] : memref<24x160xf32, #tpu.memory_space<vmem>>, vector<8x160xf32>
    tpu.vector_store %arg8[%c16, %c0_7], %4 {strides = array<i32>} : memref<24x160xf32, #tpu.memory_space<vmem>>, vector<8x160xf32>,
    %c0_8 = arith.constant 0 : index
    %c0_9 = arith.constant 0 : index
    %6 = vector.load %arg8[%c0_8, %c0_9] : memref<24x160xf32, #tpu.memory_space<vmem>>, vector<16x160xf32>
    %c1 = arith.constant 1 : index
    %c0_10 = arith.constant 0 : index
    %7 = vector.load %arg8[%c1, %c0_10] : memref<24x160xf32, #tpu.memory_space<vmem>>, vector<16x160xf32>
    %c2 = arith.constant 2 : index
    %c0_11 = arith.constant 0 : index
    %8 = vector.load %arg8[%c2, %c0_11] : memref<24x160xf32, #tpu.memory_space<vmem>>, vector<16x160xf32>
    %9 = tpu.concatenate %6, %7, %8 in 1 : vector<16x160xf32>, vector<16x160xf32>, vector<16x160xf32> -> vector<16x480xf32>
    %10 = arith.truncf %9 : vector<16x480xf32> to vector<16x480xbf16>
    %11 = arith.extf %10 : vector<16x480xbf16> to vector<16x480xf32>
    %12 = arith.subf %9, %11 : vector<16x480xf32>
    %13 = arith.truncf %12 : vector<16x480xf32> to vector<16x480xbf16>
    %c0_12 = arith.constant 0 : index
    %c0_13 = arith.constant 0 : index
    %14 = vector.load %arg4[%c0_12, %c0_13] : memref<480x512xbf16, #tpu.memory_space<vmem>>, vector<480x512xbf16>
    %cst = arith.constant dense<0.000000e+00> : vector<16x512xf32>
    %15 = tpu.matmul %10, %14, %cst {dimension_numbers = #tpu.dot_dimension_numbers<[1], [0], [0], [1], [0, 0, 1, 1], [], []>} : vector<16x480xbf16>, vector<480x512xbf16>, vector<16x512xf32> -> vector<16x512xf32>
    %c0_14 = arith.constant 0 : index
    %c0_15 = arith.constant 0 : index
    %16 = vector.load %arg5[%c0_14, %c0_15] : memref<480x512xbf16, #tpu.memory_space<vmem>>, vector<480x512xbf16>
    %cst_16 = arith.constant dense<0.000000e+00> : vector<16x512xf32>
    %17 = tpu.matmul %10, %16, %cst_16 {dimension_numbers = #tpu.dot_dimension_numbers<[1], [0], [0], [1], [0, 0, 1, 1], [], []>} : vector<16x480xbf16>, vector<480x512xbf16>, vector<16x512xf32> -> vector<16x512xf32>
    %18 = arith.addf %15, %17 : vector<16x512xf32>
    %c0_17 = arith.constant 0 : index
    %c0_18 = arith.constant 0 : index
    %19 = vector.load %arg4[%c0_17, %c0_18] : memref<480x512xbf16, #tpu.memory_space<vmem>>, vector<480x512xbf16>
    %cst_19 = arith.constant dense<0.000000e+00> : vector<16x512xf32>
    %20 = tpu.matmul %13, %19, %cst_19 {dimension_numbers = #tpu.dot_dimension_numbers<[1], [0], [0], [1], [0, 0, 1, 1], [], []>} : vector<16x480xbf16>, vector<480x512xbf16>, vector<16x512xf32> -> vector<16x512xf32>
    %21 = arith.addf %18, %20 : vector<16x512xf32>
    %22 = vector.extract_strided_slice %21 {offsets = [0, 0], sizes = [16, 256], strides = [1, 1]} : vector<16x512xf32> to vector<16x256xf32>
    %23 = vector.extract_strided_slice %21 {offsets = [0, 256], sizes = [16, 256], strides = [1, 1]} : vector<16x512xf32> to vector<16x256xf32>
    %24 = arith.mulf %22, %22 : vector<16x256xf32>
    %25 = arith.mulf %23, %23 : vector<16x256xf32>
    %26 = arith.addf %24, %25 : vector<16x256xf32>
    %27 = arith.truncf %26 : vector<16x256xf32> to vector<16x256xbf16>
    %28 = arith.extf %27 : vector<16x256xbf16> to vector<16x256xf32>
    %29 = arith.subf %26, %28 : vector<16x256xf32>
    %30 = arith.truncf %29 : vector<16x256xf32> to vector<16x256xbf16>
    %c0_20 = arith.constant 0 : index
    %c0_21 = arith.constant 0 : index
    %31 = vector.load %arg6[%c0_20, %c0_21] : memref<256x256xbf16, #tpu.memory_space<vmem>>, vector<256x256xbf16>
    %cst_22 = arith.constant dense<0.000000e+00> : vector<16x256xf32>
    %32 = tpu.matmul %27, %31, %cst_22 {dimension_numbers = #tpu.dot_dimension_numbers<[1], [0], [0], [1], [0, 0, 1, 1], [], []>} : vector<16x256xbf16>, vector<256x256xbf16>, vector<16x256xf32> -> vector<16x256xf32>
    %33 = vector.extract_strided_slice %32 {offsets = [0, 0], sizes = [16, 128], strides = [1, 1]} : vector<16x256xf32> to vector<16x128xf32>
    %34 = vector.extract_strided_slice %32 {offsets = [0, 128], sizes = [16, 128], strides = [1, 1]} : vector<16x256xf32> to vector<16x128xf32>
    %35 = arith.addf %33, %34 : vector<16x128xf32>
    %c0_23 = arith.constant 0 : index
    %c0_24 = arith.constant 0 : index
    %36 = vector.load %arg6[%c0_23, %c0_24] : memref<256x256xbf16, #tpu.memory_space<vmem>>, vector<256x128xbf16>
    %cst_25 = arith.constant dense<0.000000e+00> : vector<16x128xf32>
    %37 = tpu.matmul %30, %36, %cst_25 {dimension_numbers = #tpu.dot_dimension_numbers<[1], [0], [0], [1], [0, 0, 1, 1], [], []>} : vector<16x256xbf16>, vector<256x128xbf16>, vector<16x128xf32> -> vector<16x128xf32>
    %38 = arith.addf %35, %37 : vector<16x128xf32>
    %cst_26 = arith.constant 9.99999997E-7 : f32
    %39 = vector.broadcast %cst_26 : f32 to vector<16x128xf32>
    %40 = arith.addf %38, %39 : vector<16x128xf32>
    %41 = math.log %40 : vector<16x128xf32>
    %cst_27 = arith.constant 0.434294492 : f32
    %42 = vector.broadcast %cst_27 : f32 to vector<16x128xf32>
    %43 = arith.mulf %41, %42 : vector<16x128xf32>
    %c0_28 = arith.constant 0 : index
    %c0_29 = arith.constant 0 : index
    %c0_30 = arith.constant 0 : index
    %44 = vector.load %arg7[%c0_28, %c0_29, %c0_30] : memref<1x16x128xf32, #tpu.memory_space<vmem>>, vector<1x16x128xf32>
    %45 = vector.shape_cast %44 : vector<1x16x128xf32> to vector<16x128xf32>
    %46 = vector.shape_cast %43 : vector<16x128xf32> to vector<1x16x128xf32>
    tpu.vector_store %arg7[%c0_28, %c0_29, %c0_30], %46 {strides = array<i32>} : memref<1x16x128xf32, #tpu.memory_space<vmem>>, vector<1x16x128xf32>,
    return
  }
  func.func @transform_0(%arg0: i32, %arg1: i32) -> (i32, i32, i32) {
    %c0_i32 = arith.constant 0 : i32
    %c0_i32_0 = arith.constant 0 : i32
    return %arg0, %arg1, %c0_i32 : i32, i32, i32
  }
  func.func @transform_1(%arg0: i32, %arg1: i32) -> (i32, i32, i32) {
    %c1_i32 = arith.constant 1 : i32
    %0 = arith.addi %arg1, %c1_i32 : i32
    %c2_i32 = arith.constant 2 : i32
    %1 = arith.muli %0, %c2_i32 : i32
    %c0_i32 = arith.constant 0 : i32
    %c0_i32_0 = arith.constant 0 : i32
    return %arg0, %1, %c0_i32 : i32, i32, i32
  }
  func.func @transform_2(%arg0: i32, %arg1: i32) -> (i32, i32) {
    %c0_i32 = arith.constant 0 : i32
    %c0_i32_0 = arith.constant 0 : i32
    %c0_i32_1 = arith.constant 0 : i32
    return %c0_i32, %c0_i32_0 : i32, i32
  }
  func.func @transform_3(%arg0: i32, %arg1: i32) -> (i32, i32) {
    %c0_i32 = arith.constant 0 : i32
    %c0_i32_0 = arith.constant 0 : i32
    %c0_i32_1 = arith.constant 0 : i32
    return %c0_i32, %c0_i32_0 : i32, i32
  }
  func.func @transform_4(%arg0: i32, %arg1: i32) -> (i32, i32) {
    %c0_i32 = arith.constant 0 : i32
    %c0_i32_0 = arith.constant 0 : i32
    %c0_i32_1 = arith.constant 0 : i32
    return %c0_i32, %c0_i32_0 : i32, i32
  }
  func.func @transform_5(%arg0: i32, %arg1: i32) -> (i32, i32, i32) {
    %c0_i32 = arith.constant 0 : i32
    %c0_i32_0 = arith.constant 0 : i32
    return %arg0, %arg1, %c0_i32 : i32, i32, i32
  }
}

</mosaic_0001>

<llo_original>
// kernel: reverse.1
$region0: #{reverse.1}
  %s0 = inlined_call_operand.vmem [shape: f32[2,256], index: 0, kind: input, shape index: {}]
  %s1 = inlined_call_operand.vmem [shape: f32[2,256], index: 1, kind: output, shape index: {}]
  %v2 = vlaneseq
  %v3 = vsub.s32 127, %v2
  %4 = vset.pattern.permute.xlu0 %v3
  $region1: #{reverse.1} parent=0
    #allocation0 [shape = 'u8[4096]{0}', space=vmem, size = 0x1000, scoped, tag = 'operand span for operand 0']
    #allocation1 [shape = 'u8[2048]{0}', space=vmem, size = 0x800, scoped, tag = 'packed  for operand 0']
    #allocation2 [shape = 'u8[4096]{0}', space=vmem, size = 0x1000, scoped, tag = 'operand span for operand 1']
    #allocation3 [shape = 'u8[2048]{0}', space=vmem, size = 0x800, scoped, tag = 'packed  for operand 1']
    loop: start=0, step=1, limit=4
    $region2: #{reverse.1} parent=1 // loop_pre_header
      _
    $region3: #{reverse.1} parent=1 // loop_header
      %s6 = sphi 0, %s10
      %p7 = scmp.ge.s32.totalorder %s6, 4
      %s13 = sphi 0, %s25
      %s14 = sphi 0, %s21
      %s15 = sphi 0, %s13
      %s16 = sphi 0, %s14
      %s17 = sphi 0, %s15
      %s18 = sphi 0, %s16
    $region4: #{reverse.1} parent=1 // loop_header_branch
      %9 = sbr.rel (%p7) target = $region8
    $region5: #{reverse.1} parent=1 // loop_body
      %s11 = ssub.s32 %s6, 1
      %s12 = ssub.s32 %s6, 2
      %s19 = sadd.s32 1, %s14
      %p20 = scmp.ge.s32.totalorder %s19, 2
      %s21 = scalar_select %p20, 0, %s19
      %s22 = sadd.s32 1, %s13
      %s23 = scalar_select %p20, %s22, %s13
      %p24 = scmp.ge.s32.totalorder %s23, 1
      %s25 = scalar_select %p24, 0, %s23
      %p26 = scmp.le.s32.totalorder 1, %s6
      %p27 = scmp.lt.s32.totalorder %s6, 3
      %p28 = pnand %p26, %p27
      %p29 = pneg %p28
      // Predicated region
      $region9: #{reverse.1} parent=5 // pred_check
        _
      $region10: #{reverse.1} parent=5 // pred_check_branch
        %31 = sbr.rel (%p28) target = $region12
      $region11: #{reverse.1} parent=5 // pred_region
        %s32 = ssub.s32 %s6, 1
      $region12: #{reverse.1} parent=5 // pred_fallthru
        _
      %p33 = scmp.lt.s32.totalorder %s6, 2
      // Predicated region
      $region13: #{reverse.1} parent=5 // pred_check
        %p34 = pneg %p33
      $region14: #{reverse.1} parent=5 // pred_check_branch
        %36 = sbr.rel (%p34) target = $region16
      $region15: #{reverse.1} parent=5 // pred_region
        %s37 = sand.u32 %s6, 1
        %s38 = sand.u32 %s6, 1
        %s39 = smul.addr %s38, 2
        %s40 = scalar_lea.vmem [#allocation1], %s39
        %s41 = ssub.s32 1, %s14
        %s42 = smul.addr %s13, 2
        %s43 = sadd.s32 %s41, %s42
        %s44 = smul.addr %s43, 2
        %s45 = scalar_lea.vmem %s0, %s44
        // Predicated region
        $region17: #{reverse.1} parent=15 // pred_check
          _
        $region18: #{reverse.1} parent=15 // pred_check_branch
          %47 = sbr.rel (0) target = $region20
        $region19: #{reverse.1} parent=15 // pred_region
          // Predicated region
          $region21: #{reverse.1} parent=19 // pred_check
            _
          $region22: #{reverse.1} parent=19 // pred_check_branch
            %49 = sbr.rel target = $region24
          $region23: #{reverse.1} parent=19 // pred_region
            // Predicated region
            $region36: #{reverse.1} parent=23 // pred_check
              _
            $region37: #{reverse.1} parent=23 // pred_check_branch
              %65 = sbr.rel (0) target = $region39
            $region38: #{reverse.1} parent=23 // pred_region
              %s67 = ssub.s32 4, 1
              loop: start=0, step=1, limit=1
              $region40: #{reverse.1} parent=38 // loop_pre_header
                _
              $region41: #{reverse.1} parent=38 // loop_header
                %s69 = sphi 0, %s73
                %p70 = scmp.ge.s32.totalorder %s69, 1
                %s74 = sphi %s45, %s45
                %s75 = sphi %s40, %s40
              $region42: #{reverse.1} parent=38 // loop_header_branch
                %72 = sbr.rel (%p70) target = $region46
              $region43: #{reverse.1} parent=38 // loop_body
                %v76 = vld [vmem:[%s74] sm:%s67]
                %77 = vst [vmem:[%s75] sm:%s67] %v76
              $region44: #{reverse.1} parent=38 // loop_footer
                %s73 = sadd.s32 1, %s69
              $region45: #{reverse.1} parent=38 // loop_footer_branch
                %68 = sbr.rel target = $region41
              $region46: #{reverse.1} parent=38 // loop_exit
                _
            $region39: #{reverse.1} parent=23 // pred_fallthru
              _
          $region24: #{reverse.1} parent=19 // pred_fallthru
            _
          // Predicated region
          $region25: #{reverse.1} parent=19 // pred_check
            _
          $region26: #{reverse.1} parent=19 // pred_check_branch
            %51 = sbr.rel (0) target = $region28
          $region27: #{reverse.1} parent=19 // pred_region
            %s53 = ssub.s32 4, 1
            loop: start=0, step=1, limit=1
            $region29: #{reverse.1} parent=27 // loop_pre_header
              _
            $region30: #{reverse.1} parent=27 // loop_header
              %s55 = sphi 0, %s59
              %p56 = scmp.ge.s32.totalorder %s55, 1
              %s60 = sphi %s45, %s45
              %s61 = sphi %s40, %s40
            $region31: #{reverse.1} parent=27 // loop_header_branch
              %58 = sbr.rel (%p56) target = $region35
            $region32: #{reverse.1} parent=27 // loop_body
              %v62 = vld [vmem:[%s60] sm:%s53]
              %63 = vst [vmem:[%s61] sm:%s53] %v62
            $region33: #{reverse.1} parent=27 // loop_footer
              %s59 = sadd.s32 1, %s55
            $region34: #{reverse.1} parent=27 // loop_footer_branch
              %54 = sbr.rel target = $region30
            $region35: #{reverse.1} parent=27 // loop_exit
              _
          $region28: #{reverse.1} parent=19 // pred_fallthru
            _
        $region20: #{reverse.1} parent=15 // pred_fallthru
          _
        %78 = vnop
      $region16: #{reverse.1} parent=5 // pred_fallthru
        _
      %p79 = scmp.le.s32.totalorder 1, %s6
      %p80 = scmp.lt.s32.totalorder %s6, 3
      %p81 = pnand %p79, %p80
      %p82 = pneg %p81
      // Predicated region
      $region47: #{reverse.1} parent=5 // pred_check
        _
      $region48: #{reverse.1} parent=5 // pred_check_branch
        %84 = sbr.rel (%p81) target = $region50
      $region49: #{reverse.1} parent=5 // pred_region
        %s85 = ssub.s32 %s6, 1
        %s86 = sand.u32 %s11, 1
        %s87 = sand.u32 %s11, 1
        %s88 = smul.addr %s87, 2
        %s89 = scalar_lea.vmem [#allocation1], %s88
        %s90 = sand.u32 %s11, 1
        %s91 = sand.u32 %s11, 1
        %s92 = smul.addr %s91, 2
        %s93 = scalar_lea.vmem [#allocation1], %s92
        %s94 = sand.u32 %s11, 1
        %s95 = sand.u32 %s11, 1
        %s96 = smul.addr %s95, 2
        %s97 = scalar_lea.vmem [#allocation3], %s96
        %s99 = ssub.s32 4, 1
        %v100 = vld [vmem:[%s93] sm:%s99]
        %101 = vst [vmem:[#allocation0] sm:%s99] %v100
        %s102 = ssub.s32 1, %s16
        %v103 = vld [vmem:[#allocation0] sm:$0xff]
        %104 = vperm.xlu0 %4, %v103
        %v105 = vpop.permute.xlu0 %104
        %106 = vst [vmem:[#allocation2] sm:$0xff] %v105
        %s108 = ssub.s32 4, 1
        %v109 = vld [vmem:[#allocation2] sm:%s108]
        %s111 = ssub.s32 4, 1
        %112 = vst [vmem:[%s97] sm:%s111] %v109
        %s113 = sand.u32 %s11, 1
        %s114 = sand.u32 %s11, 1
        %s115 = smul.addr %s114, 2
        %s116 = scalar_lea.vmem [#allocation3], %s115
        %s117 = smul.addr %s15, 2
        %s118 = sadd.s32 %s16, %s117
        %s119 = smul.addr %s118, 2
        %s120 = scalar_lea.vmem %s1, %s119
        // Predicated region
        $region51: #{reverse.1} parent=49 // pred_check
          _
        $region52: #{reverse.1} parent=49 // pred_check_branch
          %122 = sbr.rel (0) target = $region54
        $region53: #{reverse.1} parent=49 // pred_region
          // Predicated region
          $region55: #{reverse.1} parent=53 // pred_check
            _
          $region56: #{reverse.1} parent=53 // pred_check_branch
            %124 = sbr.rel target = $region58
          $region57: #{reverse.1} parent=53 // pred_region
            // Predicated region
            $region70: #{reverse.1} parent=57 // pred_check
              _
            $region71: #{reverse.1} parent=57 // pred_check_branch
              %140 = sbr.rel (0) target = $region73
            $region72: #{reverse.1} parent=57 // pred_region
              %s142 = ssub.s32 4, 1
              loop: start=0, step=1, limit=1
              $region74: #{reverse.1} parent=72 // loop_pre_header
                _
              $region75: #{reverse.1} parent=72 // loop_header
                %s144 = sphi 0, %s148
                %p145 = scmp.ge.s32.totalorder %s144, 1
                %s149 = sphi %s116, %s116
                %s150 = sphi %s120, %s120
              $region76: #{reverse.1} parent=72 // loop_header_branch
                %147 = sbr.rel (%p145) target = $region80
              $region77: #{reverse.1} parent=72 // loop_body
                %v151 = vld [vmem:[%s149] sm:%s142]
                %152 = vst [vmem:[%s150] sm:%s142] %v151
              $region78: #{reverse.1} parent=72 // loop_footer
                %s148 = sadd.s32 1, %s144
              $region79: #{reverse.1} parent=72 // loop_footer_branch
                %143 = sbr.rel target = $region75
              $region80: #{reverse.1} parent=72 // loop_exit
                _
            $region73: #{reverse.1} parent=57 // pred_fallthru
              _
          $region58: #{reverse.1} parent=53 // pred_fallthru
            _
          // Predicated region
          $region59: #{reverse.1} parent=53 // pred_check
            _
          $region60: #{reverse.1} parent=53 // pred_check_branch
            %126 = sbr.rel (0) target = $region62
          $region61: #{reverse.1} parent=53 // pred_region
            %s128 = ssub.s32 4, 1
            loop: start=0, step=1, limit=1
            $region63: #{reverse.1} parent=61 // loop_pre_header
              _
            $region64: #{reverse.1} parent=61 // loop_header
              %s130 = sphi 0, %s134
              %p131 = scmp.ge.s32.totalorder %s130, 1
              %s135 = sphi %s116, %s116
              %s136 = sphi %s120, %s120
            $region65: #{reverse.1} parent=61 // loop_header_branch
              %133 = sbr.rel (%p131) target = $region69
            $region66: #{reverse.1} parent=61 // loop_body
              %v137 = vld [vmem:[%s135] sm:%s128]
              %138 = vst [vmem:[%s136] sm:%s128] %v137
            $region67: #{reverse.1} parent=61 // loop_footer
              %s134 = sadd.s32 1, %s130
            $region68: #{reverse.1} parent=61 // loop_footer_branch
              %129 = sbr.rel target = $region64
            $region69: #{reverse.1} parent=61 // loop_exit
              _
          $region62: #{reverse.1} parent=53 // pred_fallthru
            _
        $region54: #{reverse.1} parent=49 // pred_fallthru
          _
        %153 = vnop
      $region50: #{reverse.1} parent=5 // pred_fallthru
        _
      %p154 = scmp.le.s32.totalorder 2, %s6
      // Predicated region
      $region81: #{reverse.1} parent=5 // pred_check
        %p155 = pneg %p154
      $region82: #{reverse.1} parent=5 // pred_check_branch
        %157 = sbr.rel (%p155) target = $region84
      $region83: #{reverse.1} parent=5 // pred_region
        %s158 = ssub.s32 %s6, 2
        %s159 = sand.u32 %s12, 1
        %s160 = sand.u32 %s12, 1
        %s161 = smul.addr %s160, 2
        %s162 = scalar_lea.vmem [#allocation3], %s161
      $region84: #{reverse.1} parent=5 // pred_fallthru
        _
    $region6: #{reverse.1} parent=1 // loop_footer
      %s10 = sadd.s32 1, %s6
    $region7: #{reverse.1} parent=1 // loop_footer_branch
      %5 = sbr.rel target = $region3
    $region8: #{reverse.1} parent=1 // loop_exit
      _

// kernel: logmel.1
$region0: #{logmel.1}
  #allocation0 [shape = 'u32[]', space=smem, size = 0x4, offset = 0x4, fixed_abs, tag = 'smem constant byte address 0x4 - core index']
  #allocation1 [shape = 'u32[72,128]{1,0:T(1,128)}', space=vmem, size = 0x9000, scoped, tag = 'internal scratch']
  #allocation2 [shape = 'f32[24,160]{1,0:T(8,128)}', space=vmem, size = 0x6000, scoped, tag = 'scratch operand']
  %s0 = inlined_call_operand.vmem [shape: f32[2,24,160], index: 0, kind: input, shape index: {}, may-alias: {0,1}]
  %s1 = inlined_call_operand.vmem [shape: f32[2,24,160], index: 1, kind: input, shape index: {}, may-alias: {0,1}]
  %s2 = inlined_call_operand.hbm [shape: bf16[480,512], index: 2, kind: input, shape index: {}]
  %s3 = inlined_call_operand.hbm [shape: bf16[480,512], index: 3, kind: input, shape index: {}]
  %s4 = inlined_call_operand.vmem [shape: bf16[256,256], index: 4, kind: input, shape index: {}]
  %s5 = inlined_call_operand.vmem [shape: f32[2,16,128], index: 5, kind: output, shape index: {}]
  %s6 = sld [smem:[#allocation0]]
  $region61: #{logmel.1} parent=0
    _
  %s8 = ssub.s32 1, %s6
  %s9 = scalar_select 0, %s8, %s6
  $region1: #{logmel.1} parent=0
    #allocation3 [shape = 'u8[491520]{0}', space=vmem, size = 0x78000, scoped, tag = 'input window, operand 2, single buffered']
    #allocation4 [shape = 's32[2]{0}', space=sflag, size = 0x8, scoped, tag = 'scoped memory for logmel.1']
    #allocation5 [shape = 'u8[491520]{0}', space=vmem, size = 0x78000, scoped, tag = 'input window, operand 3, single buffered']
    #allocation6 [shape = 's32[1]{0}', space=sflag, size = 0x4, scoped, tag = 'scoped memory for logmel.1']
    %10 = vsyncpa [#allocation4], 0
    %11 = vsyncpa [#allocation6], 0
    loop: start=0, step=1, limit=4
    $region2: #{logmel.1} parent=1 // loop_pre_header
      _
    $region3: #{logmel.1} parent=1 // loop_header
      %s13 = sphi 0, %s17
      %p14 = scmp.ge.s32.totalorder %s13, 4
      %s20 = sphi 0, %s32
      %s21 = sphi 0, %s28
      %s22 = sphi 0, %s20
      %s23 = sphi 0, %s21
      %s24 = sphi 0, %s22
      %s25 = sphi 0, %s23
      %s37 = sphi 0, %s39
      %s40 = sphi 0, %s37
      %s41 = sphi 0, %s40
      %s57 = sphi 0, %s41
      %s69 = sphi 0, %s71
      %s72 = sphi 0, %s69
      %s73 = sphi 0, %s72
      %s89 = sphi 0, %s73
      %s93 = sphi 0, %s93
      %s95 = sphi 0, %s93
      %s96 = sphi 0, %s95
      %s110 = sphi 0, %s96
      %s114 = sphi 0, %s114
      %s116 = sphi 0, %s114
      %s117 = sphi 0, %s116
      %s131 = sphi 0, %s117
      %s135 = sphi 0, %s135
      %s137 = sphi 0, %s135
      %s138 = sphi 0, %s137
      %s152 = sphi 0, %s138
      %s160 = sphi 0, %s162
      %s163 = sphi 0, %s160
      %s164 = sphi 0, %s163
      %s180 = sphi 0, %s164
    $region4: #{logmel.1} parent=1 // loop_header_branch
      %16 = sbr.rel (%p14) target = $region8
    $region5: #{logmel.1} parent=1 // loop_body
      %s18 = ssub.s32 %s13, 1
      %s19 = ssub.s32 %s13, 2
      %s26 = sadd.s32 1, %s21
      %p27 = scmp.ge.s32.totalorder %s26, 1
      %s28 = scalar_select %p27, 0, %s26
      %s29 = sadd.s32 1, %s20
      %s30 = scalar_select %p27, %s29, %s20
      %p31 = scmp.ge.s32.totalorder %s30, 2
      %s32 = scalar_select %p31, 0, %s30
      %s33 = ssub.s32 %s20, %s32
      %s34 = ssub.s32 %s21, %s28
      %s35 = sor.u32 %s33, %s34
      %p36 = scmp.eq.s32.totalorder %s35, 0
      %s38 = sadd.s32 %s37, 1
      %s39 = scalar_select %p36, %s37, %s38
      %p42 = pneg %p36
      %p43 = scmp.eq.s32.totalorder %s13, 1
      %p44 = por %p42, %p43
      %p45 = scmp.ne.s32.totalorder %s37, %s40
      %p46 = scmp.eq.s32.totalorder %s13, 0
      %p47 = por %p45, %p46
      %p48 = scmp.ne.s32.totalorder %s37, %s40
      %p49 = scmp.eq.s32.totalorder %s18, 1
      %p50 = por %p48, %p49
      %p51 = scmp.ne.s32.totalorder %s40, %s41
      %p52 = scmp.eq.s32.totalorder %s18, 0
      %p53 = por %p51, %p52
      %p54 = scmp.ne.s32.totalorder %s40, %s41
      %p55 = scmp.eq.s32.totalorder %s19, 1
      %p56 = por %p54, %p55
      %p58 = scmp.ne.s32.totalorder %s41, %s57
      %p59 = scmp.eq.s32.totalorder %s19, 0
      %p60 = por %p58, %p59
      %s61 = sadd.s32 %s21, 1
      %s62 = smul.u32 %s61, 2
      %s63 = sadd.s32 %s28, 1
      %s64 = smul.u32 %s63, 2
      %s65 = ssub.s32 %s20, %s32
      %s66 = ssub.s32 %s62, %s64
      %s67 = sor.u32 %s65, %s66
      %p68 = scmp.eq.s32.totalorder %s67, 0
      %s70 = sadd.s32 %s69, 1
      %s71 = scalar_select %p68, %s69, %s70
      %p74 = pneg %p68
      %p75 = scmp.eq.s32.totalorder %s13, 1
      %p76 = por %p74, %p75
      %p77 = scmp.ne.s32.totalorder %s69, %s72
      %p78 = scmp.eq.s32.totalorder %s13, 0
      %p79 = por %p77, %p78
      %p80 = scmp.ne.s32.totalorder %s69, %s72
      %p81 = scmp.eq.s32.totalorder %s18, 1
      %p82 = por %p80, %p81
      %p83 = scmp.ne.s32.totalorder %s72, %s73
      %p84 = scmp.eq.s32.totalorder %s18, 0
      %p85 = por %p83, %p84
      %p86 = scmp.ne.s32.totalorder %s72, %s73
      %p87 = scmp.eq.s32.totalorder %s19, 1
      %p88 = por %p86, %p87
      %p90 = scmp.ne.s32.totalorder %s73, %s89
      %p91 = scmp.eq.s32.totalorder %s19, 0
      %p92 = por %p90, %p91
      %s94 = sadd.s32 %s93, 1
      %p97 = scmp.eq.s32.totalorder %s13, 1
      %p98 = scmp.ne.s32.totalorder %s93, %s95
      %p99 = scmp.eq.s32.totalorder %s13, 0
      %p100 = por %p98, %p99
      %p101 = scmp.ne.s32.totalorder %s93, %s95
      %p102 = scmp.eq.s32.totalorder %s18, 1
      %p103 = por %p101, %p102
      %p104 = scmp.ne.s32.totalorder %s95, %s96
      %p105 = scmp.eq.s32.totalorder %s18, 0
      %p106 = por %p104, %p105
      %p107 = scmp.ne.s32.totalorder %s95, %s96
      %p108 = scmp.eq.s32.totalorder %s19, 1
      %p109 = por %p107, %p108
      %p111 = scmp.ne.s32.totalorder %s96, %s110
      %p112 = scmp.eq.s32.totalorder %s19, 0
      %p113 = por %p111, %p112
      %s115 = sadd.s32 %s114, 1
      %p118 = scmp.eq.s32.totalorder %s13, 1
      %p119 = scmp.ne.s32.totalorder %s114, %s116
      %p120 = scmp.eq.s32.totalorder %s13, 0
      %p121 = por %p119, %p120
      %p122 = scmp.ne.s32.totalorder %s114, %s116
      %p123 = scmp.eq.s32.totalorder %s18, 1
      %p124 = por %p122, %p123
      %p125 = scmp.ne.s32.totalorder %s116, %s117
      %p126 = scmp.eq.s32.totalorder %s18, 0
      %p127 = por %p125, %p126
      %p128 = scmp.ne.s32.totalorder %s116, %s117
      %p129 = scmp.eq.s32.totalorder %s19, 1
      %p130 = por %p128, %p129
      %p132 = scmp.ne.s32.totalorder %s117, %s131
      %p133 = scmp.eq.s32.totalorder %s19, 0
      %p134 = por %p132, %p133
      %s136 = sadd.s32 %s135, 1
      %p139 = scmp.eq.s32.totalorder %s13, 1
      %p140 = scmp.ne.s32.totalorder %s135, %s137
      %p141 = scmp.eq.s32.totalorder %s13, 0
      %p142 = por %p140, %p141
      %p143 = scmp.ne.s32.totalorder %s135, %s137
      %p144 = scmp.eq.s32.totalorder %s18, 1
      %p145 = por %p143, %p144
      %p146 = scmp.ne.s32.totalorder %s137, %s138
      %p147 = scmp.eq.s32.totalorder %s18, 0
      %p148 = por %p146, %p147
      %p149 = scmp.ne.s32.totalorder %s137, %s138
      %p150 = scmp.eq.s32.totalorder %s19, 1
      %p151 = por %p149, %p150
      %p153 = scmp.ne.s32.totalorder %s138, %s152
      %p154 = scmp.eq.s32.totalorder %s19, 0
      %p155 = por %p153, %p154
      %s156 = ssub.s32 %s20, %s32
      %s157 = ssub.s32 %s21, %s28
      %s158 = sor.u32 %s156, %s157
      %p159 = scmp.eq.s32.totalorder %s158, 0
      %s161 = sadd.s32 %s160, 1
      %s162 = scalar_select %p159, %s160, %s161
      %p165 = pneg %p159
      %p166 = scmp.eq.s32.totalorder %s13, 1
      %p167 = por %p165, %p166
      %p168 = scmp.ne.s32.totalorder %s160, %s163
      %p169 = scmp.eq.s32.totalorder %s13, 0
      %p170 = por %p168, %p169
      %p171 = scmp.ne.s32.totalorder %s160, %s163
      %p172 = scmp.eq.s32.totalorder %s18, 1
      %p173 = por %p171, %p172
      %p174 = scmp.ne.s32.totalorder %s163, %s164
      %p175 = scmp.eq.s32.totalorder %s18, 0
      %p176 = por %p174, %p175
      %p177 = scmp.ne.s32.totalorder %s163, %s164
      %p178 = scmp.eq.s32.totalorder %s19, 1
      %p179 = por %p177, %p178
      %p181 = scmp.ne.s32.totalorder %s164, %s180
      %p182 = scmp.eq.s32.totalorder %s19, 0
      %p183 = por %p181, %p182
      %p184 = scmp.le.s32.totalorder 1, %s13
      %p185 = scmp.lt.s32.totalorder %s13, 3
      %p186 = pnand %p184, %p185
      %p187 = pneg %p186
      // Predicated region
      $region9: #{logmel.1} parent=5 // pred_check
        _
      $region10: #{logmel.1} parent=5 // pred_check_branch
        %189 = sbr.rel (%p186) target = $region12
      $region11: #{logmel.1} parent=5 // pred_region
        %s190 = ssub.s32 %s13, 1
        // Predicated region
        $region13: #{logmel.1} parent=11 // pred_check
          %p191 = pneg %p106
        $region14: #{logmel.1} parent=11 // pred_check_branch
          %193 = sbr.rel (%p191) target = $region16
        $region15: #{logmel.1} parent=11 // pred_region
          %195 = vsyncadd [#allocation4], 0
          %s196 = sshll.u32 %s2, 4
          %s197 = int_to_ptr.hbm [resolvable:$true] %s196
          %s198 = sshll.u32 [#allocation3], 4
          %s199 = int_to_ptr.vmem [resolvable:$true] %s198
          %204 = dma.hbm_to_vmem [thread:$0]  %s197, 15360, %s199, [#allocation4], 256, 256, 16
        $region16: #{logmel.1} parent=11 // pred_fallthru
          _
        // Predicated region
        $region17: #{logmel.1} parent=11 // pred_check
          %p205 = pneg %p127
        $region18: #{logmel.1} parent=11 // pred_check_branch
          %207 = sbr.rel (%p205) target = $region20
        $region19: #{logmel.1} parent=11 // pred_region
          %209 = vsyncadd [#allocation6], 0
          %s210 = sshll.u32 %s3, 4
          %s211 = int_to_ptr.hbm [resolvable:$true] %s210
          %s212 = sshll.u32 [#allocation5], 4
          %s213 = int_to_ptr.vmem [resolvable:$true] %s212
          %218 = dma.hbm_to_vmem [thread:$0]  %s211, 15360, %s213, [#allocation6], 256, 256, 16
        $region20: #{logmel.1} parent=11 // pred_fallthru
          _
        // Predicated region
        $region21: #{logmel.1} parent=11 // pred_check
          %p219 = pneg %p148
        $region22: #{logmel.1} parent=11 // pred_check_branch
          %221 = sbr.rel (%p219) target = $region24
        $region23: #{logmel.1} parent=11 // pred_region
          _
        $region24: #{logmel.1} parent=11 // pred_fallthru
          _
      $region12: #{logmel.1} parent=5 // pred_fallthru
        _
      %p222 = scmp.lt.s32.totalorder %s13, 2
      // Predicated region
      $region25: #{logmel.1} parent=5 // pred_check
        %p223 = pneg %p222
      $region26: #{logmel.1} parent=5 // pred_check_branch
        %225 = sbr.rel (%p223) target = $region28
      $region27: #{logmel.1} parent=5 // pred_region
        // Predicated region
        $region29: #{logmel.1} parent=27 // pred_check
          %p226 = pneg %p47
        $region30: #{logmel.1} parent=27 // pred_check_branch
          %228 = sbr.rel (%p226) target = $region32
        $region31: #{logmel.1} parent=27 // pred_region
          %s229 = smul.u32 2, %s21
          %s230 = ssub.s32 3, %s229
          %p231 = scmp.lt.s32.totalorder %s230, 2
          %s232 = scalar_select %p231, %s230, 2
          %s233 = smul.u32 8, %s232
          %s234 = smul.u32 %s233, 2
          %p235 = scmp.lt.s32.totalorder %s20, 1
          %s236 = scalar_select %p235, %s20, 1
          %p237 = scmp.lt.s32.totalorder %s229, 2
          %s238 = scalar_select %p237, %s229, 2
          %s239 = smul.addr %s238, 2
          %s240 = smul.addr %s236, 6
          %s241 = sadd.s32 %s239, %s240
          %s242 = smul.addr %s241, 8
          %s243 = scalar_lea.vmem %s0, %s242
          %s244 = smul.u32 2, %s21
          %s245 = ssub.s32 3, %s244
          %p246 = scmp.lt.s32.totalorder %s245, 2
          %s247 = scalar_select %p246, %s245, 2
          %s248 = smul.u32 8, %s247
          %s249 = smul.u32 %s248, 2
        $region32: #{logmel.1} parent=27 // pred_fallthru
          _
        // Predicated region
        $region33: #{logmel.1} parent=27 // pred_check
          %p250 = pneg %p79
        $region34: #{logmel.1} parent=27 // pred_check_branch
          %252 = sbr.rel (%p250) target = $region36
        $region35: #{logmel.1} parent=27 // pred_region
          %s253 = sadd.s32 %s21, 1
          %s254 = smul.u32 %s253, 2
          %p255 = scmp.lt.s32.totalorder %s20, 1
          %s256 = scalar_select %p255, %s20, 1
          %p257 = scmp.lt.s32.totalorder %s254, 2
          %s258 = scalar_select %p257, %s254, 2
          %s259 = smul.addr %s258, 2
          %s260 = smul.addr %s256, 6
          %s261 = sadd.s32 %s259, %s260
          %s262 = smul.addr %s261, 8
          %s263 = scalar_lea.vmem %s1, %s262
          %s264 = sadd.s32 %s21, 1
          %s265 = smul.u32 %s264, 2
        $region36: #{logmel.1} parent=27 // pred_fallthru
          _
      $region28: #{logmel.1} parent=5 // pred_fallthru
        _
      %p266 = scmp.le.s32.totalorder 1, %s13
      %p267 = scmp.lt.s32.totalorder %s13, 3
      %p268 = pnand %p266, %p267
      %p269 = pneg %p268
      // Predicated region
      $region37: #{logmel.1} parent=5 // pred_check
        _
      $region38: #{logmel.1} parent=5 // pred_check_branch
        %271 = sbr.rel (%p268) target = $region40
      $region39: #{logmel.1} parent=5 // pred_region
        %s272 = ssub.s32 %s13, 1
        // Predicated region
        $region41: #{logmel.1} parent=39 // pred_check
          %p273 = pneg %p106
        $region42: #{logmel.1} parent=39 // pred_check_branch
          %275 = sbr.rel (%p273) target = $region44
        $region43: #{logmel.1} parent=39 // pred_region
          %277 = dma.done [#allocation4], 15360
        $region44: #{logmel.1} parent=39 // pred_fallthru
          _
        // Predicated region
        $region45: #{logmel.1} parent=39 // pred_check
          %p278 = pneg %p127
        $region46: #{logmel.1} parent=39 // pred_check_branch
          %280 = sbr.rel (%p278) target = $region48
        $region47: #{logmel.1} parent=39 // pred_region
          %282 = dma.done [#allocation6], 15360
        $region48: #{logmel.1} parent=39 // pred_fallthru
          _
        %s283 = smul.u32 2, %s23
        %s284 = ssub.s32 3, %s283
        %p285 = scmp.lt.s32.totalorder %s284, 2
        %s286 = scalar_select %p285, %s284, 2
        %s287 = smul.u32 8, %s286
        %s288 = smul.u32 %s287, 2
        %p289 = scmp.lt.s32.totalorder %s22, 1
        %s290 = scalar_select %p289, %s22, 1
        %p291 = scmp.lt.s32.totalorder %s283, 2
        %s292 = scalar_select %p291, %s283, 2
        %s293 = smul.addr %s292, 2
        %s294 = smul.addr %s290, 6
        %s295 = sadd.s32 %s293, %s294
        %s296 = smul.addr %s295, 8
        %s297 = scalar_lea.vmem %s0, %s296
        %p298 = pneg %p53
        %p299 = pneg %p50
        %s300 = sadd.s32 %s23, 1
        %s301 = smul.u32 %s300, 2
        %p302 = scmp.lt.s32.totalorder %s22, 1
        %s303 = scalar_select %p302, %s22, 1
        %p304 = scmp.lt.s32.totalorder %s301, 2
        %s305 = scalar_select %p304, %s301, 2
        %s306 = smul.addr %s305, 2
        %s307 = smul.addr %s303, 6
        %s308 = sadd.s32 %s306, %s307
        %s309 = smul.addr %s308, 8
        %s310 = scalar_lea.vmem %s1, %s309
        %p311 = pneg %p85
        %p312 = pneg %p82
        %p313 = pneg %p106
        %p314 = pneg %p103
        %p315 = pneg %p127
        %p316 = pneg %p124
        %p317 = pneg %p148
        %p318 = pneg %p145
        %p319 = pneg %p176
        %p320 = pneg %p173
        %s321 = smul.u32 2, %s23
        %p322 = scmp.lt.s32.totalorder %s22, 1
        %s323 = scalar_select %p322, %s22, 1
        %p324 = scmp.lt.s32.totalorder %s321, 1
        %s325 = scalar_select %p324, %s321, 1
        %s326 = smul.addr %s323, 2
        %s327 = sadd.s32 %s325, %s326
        %s328 = smul.addr %s327, 8
        %s329 = scalar_lea.vmem %s5, %s328
        %s330 = smul.u32 2, %s23
        %s331 = ssub.s32 3, %s330
        %p332 = scmp.lt.s32.totalorder %s331, 2
        %s333 = scalar_select %p332, %s331, 2
        %s334 = smul.u32 8, %s333
        %s335 = smul.u32 %s334, 2
        %p336 = scmp.lt.s32.totalorder %s22, 1
        %s337 = scalar_select %p336, %s22, 1
        %p338 = scmp.lt.s32.totalorder %s330, 2
        %s339 = scalar_select %p338, %s330, 2
        %s340 = smul.addr %s339, 2
        %s341 = smul.addr %s337, 6
        %s342 = sadd.s32 %s340, %s341
        %s343 = smul.addr %s342, 8
        %s344 = scalar_lea.vmem %s0, %s343
        %s345 = smul.u32 2, %s23
        %s346 = ssub.s32 3, %s345
        %p347 = scmp.lt.s32.totalorder %s346, 2
        %s348 = scalar_select %p347, %s346, 2
        %s349 = smul.u32 8, %s348
        %s350 = smul.u32 %s349, 2
        %s351 = sadd.s32 %s23, 1
        %s352 = smul.u32 %s351, 2
        %p353 = scmp.lt.s32.totalorder %s22, 1
        %s354 = scalar_select %p353, %s22, 1
        %p355 = scmp.lt.s32.totalorder %s352, 2
        %s356 = scalar_select %p355, %s352, 2
        %s357 = smul.addr %s356, 2
        %s358 = smul.addr %s354, 6
        %s359 = sadd.s32 %s357, %s358
        %s360 = smul.addr %s359, 8
        %s361 = scalar_lea.vmem %s1, %s360
        %s362 = sadd.s32 %s23, 1
        %s363 = smul.u32 %s362, 2
        %s364 = smul.u32 2, %s23
        %p365 = scmp.lt.s32.totalorder %s22, 1
        %s366 = scalar_select %p365, %s22, 1
        %p367 = scmp.lt.s32.totalorder %s364, 1
        %s368 = scalar_select %p367, %s364, 1
        %s369 = smul.addr %s366, 2
        %s370 = sadd.s32 %s368, %s369
        %s371 = smul.addr %s370, 8
        %s372 = scalar_lea.vmem %s5, %s371
        %s373 = smul.u32 2, %s23
        %v375 = vld [vmem:[%s344] sm:$0xff]
        %v376 = vld [vmem:[%s344 + $0x8] sm:$0xff]
        %v377 = vld [vmem:[%s344 + $0x10] sm:$0xff]
        %v378 = vld [vmem:[%s344 + $0x18] sm:$0xff]
        %379 = vst [vmem:[#allocation2] sm:$0xff] %v375
        %vm380 = vcmask 261120
        %381 = vst.msk [vmem:[#allocation2 + $0x8] sm:$0xff] %vm380, %v376
        %382 = vst [vmem:[#allocation2 + $0x10] sm:$0xff] %v377
        %383 = vst.msk [vmem:[#allocation2 + $0x18] sm:$0xff] %vm380, %v378
        %v384 = vld [vmem:[%s361] sm:$0xff]
        %v385 = vld [vmem:[%s361 + $0x8] sm:$0xff]
        %386 = vst [vmem:[#allocation2 + $0x20] sm:$0xff] %v384
        %387 = vst.msk [vmem:[#allocation2 + $0x28] sm:$0xff] %vm380, %v385
        %v388 = vld [vmem:[#allocation2] sm:$0xff]
        %v389 = vld [vmem:[#allocation2 + $0x8] sm:$0xff]
        %v390 = vld [vmem:[#allocation2 + $0x10] sm:$0xff]
        %v391 = vld [vmem:[#allocation2 + $0x18] sm:$0xff]
        %v392 = vld [vmem:[#allocation2] sm:$0xfe]
        %v393 = vld [vmem:[#allocation2 + $0x8] sm:$0xfe]
        %v394 = vld [vmem:[#allocation2 + $0x20] sm:$0x1]
        %v395 = vld [vmem:[#allocation2 + $0x28] sm:$0x1]
        %v396 = vld [vmem:[#allocation2] sm:$0xfc]
        %v397 = vld [vmem:[#allocation2 + $0x8] sm:$0xfc]
        %v398 = vld [vmem:[#allocation2 + $0x20] sm:$0x3]
        %v399 = vld [vmem:[#allocation2 + $0x28] sm:$0x3]
        %vm406 = vcmask 1046528
        %v407 = vrot.slane %v392, 1
        %v408 = vrot.slane %v390, 1
        %v409 = vsel %vm406, %v407, %v408
        %v410 = vrot.slane %v393, 1
        %v411 = vrot.slane %v391, 1
        %v412 = vsel %vm406, %v410, %v411
        %v413 = vrot.slane %v394, 1
        %v414 = vsel %vm406, %v408, %v413
        %v415 = vrot.slane %v395, 1
        %v416 = vsel %vm406, %v411, %v415
        %417 = vrot.lane.b32.xlu0 %v409, 32
        %v418 = vpop.permute.xlu0 %417
        %419 = vrot.lane.b32.xlu0 %v412, 32
        %v420 = vpop.permute.xlu0 %419
        %421 = vrot.lane.b32.xlu0 %v414, 32
        %v422 = vpop.permute.xlu0 %421
        %423 = vrot.lane.b32.xlu0 %v416, 32
        %v424 = vpop.permute.xlu0 %423
        %v425 = vsel %vm380, %v418, %v420
        %v426 = vsel %vm380, %v422, %v424
        %vm435 = vcmask 1045504
        %v436 = vrot.slane %v396, 2
        %v437 = vrot.slane %v390, 2
        %v438 = vsel %vm435, %v436, %v437
        %v439 = vrot.slane %v397, 2
        %v440 = vrot.slane %v391, 2
        %v441 = vsel %vm435, %v439, %v440
        %v442 = vrot.slane %v398, 2
        %v443 = vsel %vm435, %v437, %v442
        %v444 = vrot.slane %v399, 2
        %v445 = vsel %vm435, %v440, %v444
        %446 = vrot.lane.b32.xlu0 %v438, 64
        %v447 = vpop.permute.xlu0 %446
        %448 = vrot.lane.b32.xlu0 %v441, 64
        %v449 = vpop.permute.xlu0 %448
        %450 = vrot.lane.b32.xlu0 %v443, 64
        %v451 = vpop.permute.xlu0 %450
        %452 = vrot.lane.b32.xlu0 %v445, 64
        %v453 = vpop.permute.xlu0 %452
        %vm454 = vcmask 523264
        %v455 = vsel %vm454, %v447, %v449
        %v456 = vsel %vm454, %v451, %v453
        %v461 = vsel %vm380, %v389, %v418
        %v462 = vsel %vm380, %v391, %v422
        %v463 = vsel %vm454, %v425, %v447
        %v464 = vsel %vm454, %v426, %v451
        %v465 = vpack.c.bf16 %v461, %v388
        %v466 = vpack.c.bf16 %v455, %v463
        %v467 = vpack.c.bf16 %v462, %v390
        %v468 = vpack.c.bf16 %v456, %v464
        %v469 = vunpack.c.l.bf16 %v465
        %v470 = vunpack.c.h.bf16 %v465
        %v471 = vunpack.c.l.bf16 %v466
        %v472 = vunpack.c.h.bf16 %v466
        %v473 = vunpack.c.l.bf16 %v467
        %v474 = vunpack.c.h.bf16 %v467
        %v475 = vunpack.c.l.bf16 %v468
        %v476 = vunpack.c.h.bf16 %v468
        %v477 = vsub.f32 %v388, %v469
        %v478 = vsub.f32 %v461, %v470
        %v479 = vsub.f32 %v463, %v471
        %v480 = vsub.f32 %v455, %v472
        %v481 = vsub.f32 %v390, %v473
        %v482 = vsub.f32 %v462, %v474
        %v483 = vsub.f32 %v464, %v475
        %v484 = vsub.f32 %v456, %v476
        %v485 = vpack.c.bf16 %v481, %v477
        %v486 = vpack.c.bf16 %v482, %v478
        %v487 = vpack.c.bf16 %v483, %v479
        %v488 = vpack.c.bf16 %v484, %v480
        %v489 = vld [vmem:[#allocation3] sm:$0xff]
        %v490 = vld [vmem:[#allocation3 + $0x8] sm:$0xff]
        %v491 = vld [vmem:[#allocation3 + $0x10] sm:$0xff]
        %v492 = vld [vmem:[#allocation3 + $0x18] sm:$0xff]
        %v493 = vld [vmem:[#allocation3 + $0x20] sm:$0xff]
        %v494 = vld [vmem:[#allocation3 + $0x28] sm:$0xff]
        %v495 = vld [vmem:[#allocation3 + $0x30] sm:$0xff]
        %v496 = vld [vmem:[#allocation3 + $0x38] sm:$0xff]
        %v497 = vld [vmem:[#allocation3 + $0x40] sm:$0xff]
        %v498 = vld [vmem:[#allocation3 + $0x48] sm:$0xff]
        %v499 = vld [vmem:[#allocation3 + $0x50] sm:$0xff]
        %v500 = vld [vmem:[#allocation3 + $0x58] sm:$0xff]
        %v501 = vld [vmem:[#allocation3 + $0x60] sm:$0xff]
        %v502 = vld [vmem:[#allocation3 + $0x68] sm:$0xff]
        %v503 = vld [vmem:[#allocation3 + $0x70] sm:$0xff]
        %v504 = vld [vmem:[#allocation3 + $0x78] sm:$0xff]
        %v505 = vld [vmem:[#allocation3 + $0x80] sm:$0xff]
        %v506 = vld [vmem:[#allocation3 + $0x88] sm:$0xff]
        %v507 = vld [vmem:[#allocation3 + $0x90] sm:$0xff]
        %v508 = vld [vmem:[#allocation3 + $0x98] sm:$0xff]
        %v509 = vld [vmem:[#allocation3 + $0xa0] sm:$0xff]
        %v510 = vld [vmem:[#allocation3 + $0xa8] sm:$0xff]
        %v511 = vld [vmem:[#allocation3 + $0xb0] sm:$0xff]
        %v512 = vld [vmem:[#allocation3 + $0xb8] sm:$0xff]
        %v513 = vld [vmem:[#allocation3 + $0xc0] sm:$0xff]
        %v514 = vld [vmem:[#allocation3 + $0xc8] sm:$0xff]
        %v515 = vld [vmem:[#allocation3 + $0xd0] sm:$0xff]
        %v516 = vld [vmem:[#allocation3 + $0xd8] sm:$0xff]
        %v517 = vld [vmem:[#allocation3 + $0xe0] sm:$0xff]
        %v518 = vld [vmem:[#allocation3 + $0xe8] sm:$0xff]
        %v519 = vld [vmem:[#allocation3 + $0xf0] sm:$0xff]
        %v520 = vld [vmem:[#allocation3 + $0xf8] sm:$0xff]
        %v521 = vld [vmem:[#allocation3 + $0x100] sm:$0xff]
        %v522 = vld [vmem:[#allocation3 + $0x108] sm:$0xff]
        %v523 = vld [vmem:[#allocation3 + $0x110] sm:$0xff]
        %v524 = vld [vmem:[#allocation3 + $0x118] sm:$0xff]
        %v525 = vld [vmem:[#allocation3 + $0x120] sm:$0xff]
        %v526 = vld [vmem:[#allocation3 + $0x128] sm:$0xff]
        %v527 = vld [vmem:[#allocation3 + $0x130] sm:$0xff]
        %v528 = vld [vmem:[#allocation3 + $0x138] sm:$0xff]
        %v529 = vld [vmem:[#allocation3 + $0x140] sm:$0xff]
        %v530 = vld [vmem:[#allocation3 + $0x148] sm:$0xff]
        %v531 = vld [vmem:[#allocation3 + $0x150] sm:$0xff]
        %v532 = vld [vmem:[#allocation3 + $0x158] sm:$0xff]
        %v533 = vld [vmem:[#allocation3 + $0x160] sm:$0xff]
        %v534 = vld [vmem:[#allocation3 + $0x168] sm:$0xff]
        %v535 = vld [vmem:[#allocation3 + $0x170] sm:$0xff]
        %v536 = vld [vmem:[#allocation3 + $0x178] sm:$0xff]
        %v537 = vld [vmem:[#allocation3 + $0x180] sm:$0xff]
        %v538 = vld [vmem:[#allocation3 + $0x188] sm:$0xff]
        %v539 = vld [vmem:[#allocation3 + $0x190] sm:$0xff]
        %v540 = vld [vmem:[#allocation3 + $0x198] sm:$0xff]
        %v541 = vld [vmem:[#allocation3 + $0x1a0] sm:$0xff]
        %v542 = vld [vmem:[#allocation3 + $0x1a8] sm:$0xff]
        %v543 = vld [vmem:[#allocation3 + $0x1b0] sm:$0xff]
        %v544 = vld [vmem:[#allocation3 + $0x1b8] sm:$0xff]
        %v545 = vld [vmem:[#allocation3 + $0x1c0] sm:$0xff]
        %v546 = vld [vmem:[#allocation3 + $0x1c8] sm:$0xff]
        %v547 = vld [vmem:[#allocation3 + $0x1d0] sm:$0xff]
        %v548 = vld [vmem:[#allocation3 + $0x1d8] sm:$0xff]
        %v549 = vld [vmem:[#allocation3 + $0x1e0] sm:$0xff]
        %v550 = vld [vmem:[#allocation3 + $0x1e8] sm:$0xff]
        %v551 = vld [vmem:[#allocation3 + $0x1f0] sm:$0xff]
        %v552 = vld [vmem:[#allocation3 + $0x1f8] sm:$0xff]
        %v553 = vld [vmem:[#allocation3 + $0x200] sm:$0xff]
        %v554 = vld [vmem:[#allocation3 + $0x208] sm:$0xff]
        %v555 = vld [vmem:[#allocation3 + $0x210] sm:$0xff]
        %v556 = vld [vmem:[#allocation3 + $0x218] sm:$0xff]
        %v557 = vld [vmem:[#allocation3 + $0x220] sm:$0xff]
        %v558 = vld [vmem:[#allocation3 + $0x228] sm:$0xff]
        %v559 = vld [vmem:[#allocation3 + $0x230] sm:$0xff]
        %v560 = vld [vmem:[#allocation3 + $0x238] sm:$0xff]
        %v561 = vld [vmem:[#allocation3 + $0x240] sm:$0xff]
        %v562 = vld [vmem:[#allocation3 + $0x248] sm:$0xff]
        %v563 = vld [vmem:[#allocation3 + $0x250] sm:$0xff]
        %v564 = vld [vmem:[#allocation3 + $0x258] sm:$0xff]
        %v565 = vld [vmem:[#allocation3 + $0x260] sm:$0xff]
        %v566 = vld [vmem:[#allocation3 + $0x268] sm:$0xff]
        %v567 = vld [vmem:[#allocation3 + $0x270] sm:$0xff]
        %v568 = vld [vmem:[#allocation3 + $0x278] sm:$0xff]
        %v569 = vld [vmem:[#allocation3 + $0x280] sm:$0xff]
        %v570 = vld [vmem:[#allocation3 + $0x288] sm:$0xff]
        %v571 = vld [vmem:[#allocation3 + $0x290] sm:$0xff]
        %v572 = vld [vmem:[#allocation3 + $0x298] sm:$0xff]
        %v573 = vld [vmem:[#allocation3 + $0x2a0] sm:$0xff]
        %v574 = vld [vmem:[#allocation3 + $0x2a8] sm:$0xff]
        %v575 = vld [vmem:[#allocation3 + $0x2b0] sm:$0xff]
        %v576 = vld [vmem:[#allocation3 + $0x2b8] sm:$0xff]
        %v577 = vld [vmem:[#allocation3 + $0x2c0] sm:$0xff]
        %v578 = vld [vmem:[#allocation3 + $0x2c8] sm:$0xff]
        %v579 = vld [vmem:[#allocation3 + $0x2d0] sm:$0xff]
        %v580 = vld [vmem:[#allocation3 + $0x2d8] sm:$0xff]
        %v581 = vld [vmem:[#allocation3 + $0x2e0] sm:$0xff]
        %v582 = vld [vmem:[#allocation3 + $0x2e8] sm:$0xff]
        %v583 = vld [vmem:[#allocation3 + $0x2f0] sm:$0xff]
        %v584 = vld [vmem:[#allocation3 + $0x2f8] sm:$0xff]
        %v585 = vld [vmem:[#allocation3 + $0x300] sm:$0xff]
        %v586 = vld [vmem:[#allocation3 + $0x308] sm:$0xff]
        %v587 = vld [vmem:[#allocation3 + $0x310] sm:$0xff]
        %v588 = vld [vmem:[#allocation3 + $0x318] sm:$0xff]
        %v589 = vld [vmem:[#allocation3 + $0x320] sm:$0xff]
        %v590 = vld [vmem:[#allocation3 + $0x328] sm:$0xff]
        %v591 = vld [vmem:[#allocation3 + $0x330] sm:$0xff]
        %v592 = vld [vmem:[#allocation3 + $0x338] sm:$0xff]
        %v593 = vld [vmem:[#allocation3 + $0x340] sm:$0xff]
        %v594 = vld [vmem:[#allocation3 + $0x348] sm:$0xff]
        %v595 = vld [vmem:[#allocation3 + $0x350] sm:$0xff]
        %v596 = vld [vmem:[#allocation3 + $0x358] sm:$0xff]
        %v597 = vld [vmem:[#allocation3 + $0x360] sm:$0xff]
        %v598 = vld [vmem:[#allocation3 + $0x368] sm:$0xff]
        %v599 = vld [vmem:[#allocation3 + $0x370] sm:$0xff]
        %v600 = vld [vmem:[#allocation3 + $0x378] sm:$0xff]
        %v601 = vld [vmem:[#allocation3 + $0x380] sm:$0xff]
        %v602 = vld [vmem:[#allocation3 + $0x388] sm:$0xff]
        %v603 = vld [vmem:[#allocation3 + $0x390] sm:$0xff]
        %v604 = vld [vmem:[#allocation3 + $0x398] sm:$0xff]
        %v605 = vld [vmem:[#allocation3 + $0x3a0] sm:$0xff]
        %v606 = vld [vmem:[#allocation3 + $0x3a8] sm:$0xff]
        %v607 = vld [vmem:[#allocation3 + $0x3b0] sm:$0xff]
        %v608 = vld [vmem:[#allocation3 + $0x3b8] sm:$0xff]
        %v609 = vld [vmem:[#allocation5] sm:$0xff]
        %v610 = vld [vmem:[#allocation5 + $0x8] sm:$0xff]
        %v611 = vld [vmem:[#allocation5 + $0x10] sm:$0xff]
        %v612 = vld [vmem:[#allocation5 + $0x18] sm:$0xff]
        %v613 = vld [vmem:[#allocation5 + $0x20] sm:$0xff]
        %v614 = vld [vmem:[#allocation5 + $0x28] sm:$0xff]
        %v615 = vld [vmem:[#allocation5 + $0x30] sm:$0xff]
        %v616 = vld [vmem:[#allocation5 + $0x38] sm:$0xff]
        %v617 = vld [vmem:[#allocation5 + $0x40] sm:$0xff]
        %v618 = vld [vmem:[#allocation5 + $0x48] sm:$0xff]
        %v619 = vld [vmem:[#allocation5 + $0x50] sm:$0xff]
        %v620 = vld [vmem:[#allocation5 + $0x58] sm:$0xff]
        %v621 = vld [vmem:[#allocation5 + $0x60] sm:$0xff]
        %v622 = vld [vmem:[#allocation5 + $0x68] sm:$0xff]
        %v623 = vld [vmem:[#allocation5 + $0x70] sm:$0xff]
        %v624 = vld [vmem:[#allocation5 + $0x78] sm:$0xff]
        %v625 = vld [vmem:[#allocation5 + $0x80] sm:$0xff]
        %v626 = vld [vmem:[#allocation5 + $0x88] sm:$0xff]
        %v627 = vld [vmem:[#allocation5 + $0x90] sm:$0xff]
        %v628 = vld [vmem:[#allocation5 + $0x98] sm:$0xff]
        %v629 = vld [vmem:[#allocation5 + $0xa0] sm:$0xff]
        %v630 = vld [vmem:[#allocation5 + $0xa8] sm:$0xff]
        %v631 = vld [vmem:[#allocation5 + $0xb0] sm:$0xff]
        %v632 = vld [vmem:[#allocation5 + $0xb8] sm:$0xff]
        %v633 = vld [vmem:[#allocation5 + $0xc0] sm:$0xff]
        %v634 = vld [vmem:[#allocation5 + $0xc8] sm:$0xff]
        %v635 = vld [vmem:[#allocation5 + $0xd0] sm:$0xff]
        %v636 = vld [vmem:[#allocation5 + $0xd8] sm:$0xff]
        %v637 = vld [vmem:[#allocation5 + $0xe0] sm:$0xff]
        %v638 = vld [vmem:[#allocation5 + $0xe8] sm:$0xff]
        %v639 = vld [vmem:[#allocation5 + $0xf0] sm:$0xff]
        %v640 = vld [vmem:[#allocation5 + $0xf8] sm:$0xff]
        %v641 = vld [vmem:[#allocation5 + $0x100] sm:$0xff]
        %v642 = vld [vmem:[#allocation5 + $0x108] sm:$0xff]
        %v643 = vld [vmem:[#allocation5 + $0x110] sm:$0xff]
        %v644 = vld [vmem:[#allocation5 + $0x118] sm:$0xff]
        %v645 = vld [vmem:[#allocation5 + $0x120] sm:$0xff]
        %v646 = vld [vmem:[#allocation5 + $0x128] sm:$0xff]
        %v647 = vld [vmem:[#allocation5 + $0x130] sm:$0xff]
        %v648 = vld [vmem:[#allocation5 + $0x138] sm:$0xff]
        %v649 = vld [vmem:[#allocation5 + $0x140] sm:$0xff]
        %v650 = vld [vmem:[#allocation5 + $0x148] sm:$0xff]
        %v651 = vld [vmem:[#allocation5 + $0x150] sm:$0xff]
        %v652 = vld [vmem:[#allocation5 + $0x158] sm:$0xff]
        %v653 = vld [vmem:[#allocation5 + $0x160] sm:$0xff]
        %v654 = vld [vmem:[#allocation5 + $0x168] sm:$0xff]
        %v655 = vld [vmem:[#allocation5 + $0x170] sm:$0xff]
        %v656 = vld [vmem:[#allocation5 + $0x178] sm:$0xff]
        %v657 = vld [vmem:[#allocation5 + $0x180] sm:$0xff]
        %v658 = vld [vmem:[#allocation5 + $0x188] sm:$0xff]
        %v659 = vld [vmem:[#allocation5 + $0x190] sm:$0xff]
        %v660 = vld [vmem:[#allocation5 + $0x198] sm:$0xff]
        %v661 = vld [vmem:[#allocation5 + $0x1a0] sm:$0xff]
        %v662 = vld [vmem:[#allocation5 + $0x1a8] sm:$0xff]
        %v663 = vld [vmem:[#allocation5 + $0x1b0] sm:$0xff]
        %v664 = vld [vmem:[#allocation5 + $0x1b8] sm:$0xff]
        %v665 = vld [vmem:[#allocation5 + $0x1c0] sm:$0xff]
        %v666 = vld [vmem:[#allocation5 + $0x1c8] sm:$0xff]
        %v667 = vld [vmem:[#allocation5 + $0x1d0] sm:$0xff]
        %v668 = vld [vmem:[#allocation5 + $0x1d8] sm:$0xff]
        %v669 = vld [vmem:[#allocation5 + $0x1e0] sm:$0xff]
        %v670 = vld [vmem:[#allocation5 + $0x1e8] sm:$0xff]
        %v671 = vld [vmem:[#allocation5 + $0x1f0] sm:$0xff]
        %v672 = vld [vmem:[#allocation5 + $0x1f8] sm:$0xff]
        %v673 = vld [vmem:[#allocation5 + $0x200] sm:$0xff]
        %v674 = vld [vmem:[#allocation5 + $0x208] sm:$0xff]
        %v675 = vld [vmem:[#allocation5 + $0x210] sm:$0xff]
        %v676 = vld [vmem:[#allocation5 + $0x218] sm:$0xff]
        %v677 = vld [vmem:[#allocation5 + $0x220] sm:$0xff]
        %v678 = vld [vmem:[#allocation5 + $0x228] sm:$0xff]
        %v679 = vld [vmem:[#allocation5 + $0x230] sm:$0xff]
        %v680 = vld [vmem:[#allocation5 + $0x238] sm:$0xff]
        %v681 = vld [vmem:[#allocation5 + $0x240] sm:$0xff]
        %v682 = vld [vmem:[#allocation5 + $0x248] sm:$0xff]
        %v683 = vld [vmem:[#allocation5 + $0x250] sm:$0xff]
        %v684 = vld [vmem:[#allocation5 + $0x258] sm:$0xff]
        %v685 = vld [vmem:[#allocation5 + $0x260] sm:$0xff]
        %v686 = vld [vmem:[#allocation5 + $0x268] sm:$0xff]
        %v687 = vld [vmem:[#allocation5 + $0x270] sm:$0xff]
        %v688 = vld [vmem:[#allocation5 + $0x278] sm:$0xff]
        %v689 = vld [vmem:[#allocation5 + $0x280] sm:$0xff]
        %v690 = vld [vmem:[#allocation5 + $0x288] sm:$0xff]
        %v691 = vld [vmem:[#allocation5 + $0x290] sm:$0xff]
        %v692 = vld [vmem:[#allocation5 + $0x298] sm:$0xff]
        %v693 = vld [vmem:[#allocation5 + $0x2a0] sm:$0xff]
        %v694 = vld [vmem:[#allocation5 + $0x2a8] sm:$0xff]
        %v695 = vld [vmem:[#allocation5 + $0x2b0] sm:$0xff]
        %v696 = vld [vmem:[#allocation5 + $0x2b8] sm:$0xff]
        %v697 = vld [vmem:[#allocation5 + $0x2c0] sm:$0xff]
        %v698 = vld [vmem:[#allocation5 + $0x2c8] sm:$0xff]
        %v699 = vld [vmem:[#allocation5 + $0x2d0] sm:$0xff]
        %v700 = vld [vmem:[#allocation5 + $0x2d8] sm:$0xff]
        %v701 = vld [vmem:[#allocation5 + $0x2e0] sm:$0xff]
        %v702 = vld [vmem:[#allocation5 + $0x2e8] sm:$0xff]
        %v703 = vld [vmem:[#allocation5 + $0x2f0] sm:$0xff]
        %v704 = vld [vmem:[#allocation5 + $0x2f8] sm:$0xff]
        %v705 = vld [vmem:[#allocation5 + $0x300] sm:$0xff]
        %v706 = vld [vmem:[#allocation5 + $0x308] sm:$0xff]
        %v707 = vld [vmem:[#allocation5 + $0x310] sm:$0xff]
        %v708 = vld [vmem:[#allocation5 + $0x318] sm:$0xff]
        %v709 = vld [vmem:[#allocation5 + $0x320] sm:$0xff]
        %v710 = vld [vmem:[#allocation5 + $0x328] sm:$0xff]
        %v711 = vld [vmem:[#allocation5 + $0x330] sm:$0xff]
        %v712 = vld [vmem:[#allocation5 + $0x338] sm:$0xff]
        %v713 = vld [vmem:[#allocation5 + $0x340] sm:$0xff]
        %v714 = vld [vmem:[#allocation5 + $0x348] sm:$0xff]
        %v715 = vld [vmem:[#allocation5 + $0x350] sm:$0xff]
        %v716 = vld [vmem:[#allocation5 + $0x358] sm:$0xff]
        %v717 = vld [vmem:[#allocation5 + $0x360] sm:$0xff]
        %v718 = vld [vmem:[#allocation5 + $0x368] sm:$0xff]
        %v719 = vld [vmem:[#allocation5 + $0x370] sm:$0xff]
        %v720 = vld [vmem:[#allocation5 + $0x378] sm:$0xff]
        %v721 = vld [vmem:[#allocation5 + $0x380] sm:$0xff]
        %v722 = vld [vmem:[#allocation5 + $0x388] sm:$0xff]
        %v723 = vld [vmem:[#allocation5 + $0x390] sm:$0xff]
        %v724 = vld [vmem:[#allocation5 + $0x398] sm:$0xff]
        %v725 = vld [vmem:[#allocation5 + $0x3a0] sm:$0xff]
        %v726 = vld [vmem:[#allocation5 + $0x3a8] sm:$0xff]
        %v727 = vld [vmem:[#allocation5 + $0x3b0] sm:$0xff]
        %v728 = vld [vmem:[#allocation5 + $0x3b8] sm:$0xff]
        %v733 = vunpack.c.l.b16 %v465
        %v734 = vunpack.c.h.b16 %v465
        %v735 = vunpack.c.l.b16 %v466
        %v736 = vunpack.c.h.b16 %v466
        %v737 = vunpack.c.l.b16 %v467
        %v738 = vunpack.c.h.b16 %v467
        %v739 = vunpack.c.l.b16 %v468
        %v740 = vunpack.c.h.b16 %v468
        %v741 = vpack.c.b16 %v737, %v733
        %v742 = vpack.c.b16 %v738, %v734
        %v743 = vpack.c.b16 %v739, %v735
        %v744 = vpack.c.b16 %v740, %v736
        %v868 = vunpack.c.l.b16 %v609
        %v869 = vunpack.c.h.b16 %v609
        %v870 = vunpack.c.l.b16 %v610
        %v871 = vunpack.c.h.b16 %v610
        %v872 = vunpack.c.l.b16 %v611
        %v873 = vunpack.c.h.b16 %v611
        %v874 = vunpack.c.l.b16 %v612
        %v875 = vunpack.c.h.b16 %v612
        %v876 = vunpack.c.l.b16 %v613
        %v877 = vunpack.c.h.b16 %v613
        %v878 = vunpack.c.l.b16 %v614
        %v879 = vunpack.c.h.b16 %v614
        %v880 = vunpack.c.l.b16 %v615
        %v881 = vunpack.c.h.b16 %v615
        %v882 = vunpack.c.l.b16 %v616
        %v883 = vunpack.c.h.b16 %v616
        %v884 = vunpack.c.l.b16 %v617
        %v885 = vunpack.c.h.b16 %v617
        %v886 = vunpack.c.l.b16 %v618
        %v887 = vunpack.c.h.b16 %v618
        %v888 = vunpack.c.l.b16 %v619
        %v889 = vunpack.c.h.b16 %v619
        %v890 = vunpack.c.l.b16 %v620
        %v891 = vunpack.c.h.b16 %v620
        %v892 = vunpack.c.l.b16 %v621
        %v893 = vunpack.c.h.b16 %v621
        %v894 = vunpack.c.l.b16 %v622
        %v895 = vunpack.c.h.b16 %v622
        %v896 = vunpack.c.l.b16 %v623
        %v897 = vunpack.c.h.b16 %v623
        %v898 = vunpack.c.l.b16 %v624
        %v899 = vunpack.c.h.b16 %v624
        %v900 = vunpack.c.l.b16 %v625
        %v901 = vunpack.c.h.b16 %v625
        %v902 = vunpack.c.l.b16 %v626
        %v903 = vunpack.c.h.b16 %v626
        %v904 = vunpack.c.l.b16 %v627
        %v905 = vunpack.c.h.b16 %v627
        %v906 = vunpack.c.l.b16 %v628
        %v907 = vunpack.c.h.b16 %v628
        %v908 = vunpack.c.l.b16 %v629
        %v909 = vunpack.c.h.b16 %v629
        %v910 = vunpack.c.l.b16 %v630
        %v911 = vunpack.c.h.b16 %v630
        %v912 = vunpack.c.l.b16 %v631
        %v913 = vunpack.c.h.b16 %v631
        %v914 = vunpack.c.l.b16 %v632
        %v915 = vunpack.c.h.b16 %v632
        %v916 = vunpack.c.l.b16 %v633
        %v917 = vunpack.c.h.b16 %v633
        %v918 = vunpack.c.l.b16 %v634
        %v919 = vunpack.c.h.b16 %v634
        %v920 = vunpack.c.l.b16 %v635
        %v921 = vunpack.c.h.b16 %v635
        %v922 = vunpack.c.l.b16 %v636
        %v923 = vunpack.c.h.b16 %v636
        %v924 = vunpack.c.l.b16 %v637
        %v925 = vunpack.c.h.b16 %v637
        %v926 = vunpack.c.l.b16 %v638
        %v927 = vunpack.c.h.b16 %v638
        %v928 = vunpack.c.l.b16 %v639
        %v929 = vunpack.c.h.b16 %v639
        %v930 = vunpack.c.l.b16 %v640
        %v931 = vunpack.c.h.b16 %v640
        %v932 = vunpack.c.l.b16 %v641
        %v933 = vunpack.c.h.b16 %v641
        %v934 = vunpack.c.l.b16 %v642
        %v935 = vunpack.c.h.b16 %v642
        %v936 = vunpack.c.l.b16 %v643
        %v937 = vunpack.c.h.b16 %v643
        %v938 = vunpack.c.l.b16 %v644
        %v939 = vunpack.c.h.b16 %v644
        %v940 = vunpack.c.l.b16 %v645
        %v941 = vunpack.c.h.b16 %v645
        %v942 = vunpack.c.l.b16 %v646
        %v943 = vunpack.c.h.b16 %v646
        %v944 = vunpack.c.l.b16 %v647
        %v945 = vunpack.c.h.b16 %v647
        %v946 = vunpack.c.l.b16 %v648
        %v947 = vunpack.c.h.b16 %v648
        %v948 = vunpack.c.l.b16 %v649
        %v949 = vunpack.c.h.b16 %v649
        %v950 = vunpack.c.l.b16 %v650
        %v951 = vunpack.c.h.b16 %v650
        %v952 = vunpack.c.l.b16 %v651
        %v953 = vunpack.c.h.b16 %v651
        %v954 = vunpack.c.l.b16 %v652
        %v955 = vunpack.c.h.b16 %v652
        %v956 = vunpack.c.l.b16 %v653
        %v957 = vunpack.c.h.b16 %v653
        %v958 = vunpack.c.l.b16 %v654
        %v959 = vunpack.c.h.b16 %v654
        %v960 = vunpack.c.l.b16 %v655
        %v961 = vunpack.c.h.b16 %v655
        %v962 = vunpack.c.l.b16 %v656
        %v963 = vunpack.c.h.b16 %v656
        %v964 = vunpack.c.l.b16 %v657
        %v965 = vunpack.c.h.b16 %v657
        %v966 = vunpack.c.l.b16 %v658
        %v967 = vunpack.c.h.b16 %v658
        %v968 = vunpack.c.l.b16 %v659
        %v969 = vunpack.c.h.b16 %v659
        %v970 = vunpack.c.l.b16 %v660
        %v971 = vunpack.c.h.b16 %v660
        %v972 = vunpack.c.l.b16 %v661
        %v973 = vunpack.c.h.b16 %v661
        %v974 = vunpack.c.l.b16 %v662
        %v975 = vunpack.c.h.b16 %v662
        %v976 = vunpack.c.l.b16 %v663
        %v977 = vunpack.c.h.b16 %v663
        %v978 = vunpack.c.l.b16 %v664
        %v979 = vunpack.c.h.b16 %v664
        %v980 = vunpack.c.l.b16 %v665
        %v981 = vunpack.c.h.b16 %v665
        %v982 = vunpack.c.l.b16 %v666
        %v983 = vunpack.c.h.b16 %v666
        %v984 = vunpack.c.l.b16 %v667
        %v985 = vunpack.c.h.b16 %v667
        %v986 = vunpack.c.l.b16 %v668
        %v987 = vunpack.c.h.b16 %v668
        %v988 = vunpack.c.l.b16 %v669
        %v989 = vunpack.c.h.b16 %v669
        %v990 = vunpack.c.l.b16 %v670
        %v991 = vunpack.c.h.b16 %v670
        %v992 = vunpack.c.l.b16 %v671
        %v993 = vunpack.c.h.b16 %v671
        %v994 = vunpack.c.l.b16 %v672
        %v995 = vunpack.c.h.b16 %v672
        %v996 = vunpack.c.l.b16 %v673
        %v997 = vunpack.c.h.b16 %v673
        %v998 = vunpack.c.l.b16 %v674
        %v999 = vunpack.c.h.b16 %v674
        %v1000 = vunpack.c.l.b16 %v675
        %v1001 = vunpack.c.h.b16 %v675
        %v1002 = vunpack.c.l.b16 %v676
        %v1003 = vunpack.c.h.b16 %v676
        %v1004 = vunpack.c.l.b16 %v677
        %v1005 = vunpack.c.h.b16 %v677
        %v1006 = vunpack.c.l.b16 %v678
        %v1007 = vunpack.c.h.b16 %v678
        %v1008 = vunpack.c.l.b16 %v679
        %v1009 = vunpack.c.h.b16 %v679
        %v1010 = vunpack.c.l.b16 %v680
        %v1011 = vunpack.c.h.b16 %v680
        %v1012 = vunpack.c.l.b16 %v681
        %v1013 = vunpack.c.h.b16 %v681
        %v1014 = vunpack.c.l.b16 %v682
        %v1015 = vunpack.c.h.b16 %v682
        %v1016 = vunpack.c.l.b16 %v683
        %v1017 = vunpack.c.h.b16 %v683
        %v1018 = vunpack.c.l.b16 %v684
        %v1019 = vunpack.c.h.b16 %v684
        %v1020 = vunpack.c.l.b16 %v685
        %v1021 = vunpack.c.h.b16 %v685
        %v1022 = vunpack.c.l.b16 %v686
        %v1023 = vunpack.c.h.b16 %v686
        %v1024 = vunpack.c.l.b16 %v687
        %v1025 = vunpack.c.h.b16 %v687
        %v1026 = vunpack.c.l.b16 %v688
        %v1027 = vunpack.c.h.b16 %v688
        %v1028 = vunpack.c.l.b16 %v689
        %v1029 = vunpack.c.h.b16 %v689
        %v1030 = vunpack.c.l.b16 %v690
        %v1031 = vunpack.c.h.b16 %v690
        %v1032 = vunpack.c.l.b16 %v691
        %v1033 = vunpack.c.h.b16 %v691
        %v1034 = vunpack.c.l.b16 %v692
        %v1035 = vunpack.c.h.b16 %v692
        %v1036 = vunpack.c.l.b16 %v693
        %v1037 = vunpack.c.h.b16 %v693
        %v1038 = vunpack.c.l.b16 %v694
        %v1039 = vunpack.c.h.b16 %v694
        %v1040 = vunpack.c.l.b16 %v695
        %v1041 = vunpack.c.h.b16 %v695
        %v1042 = vunpack.c.l.b16 %v696
        %v1043 = vunpack.c.h.b16 %v696
        %v1044 = vunpack.c.l.b16 %v697
        %v1045 = vunpack.c.h.b16 %v697
        %v1046 = vunpack.c.l.b16 %v698
        %v1047 = vunpack.c.h.b16 %v698
        %v1048 = vunpack.c.l.b16 %v699
        %v1049 = vunpack.c.h.b16 %v699
        %v1050 = vunpack.c.l.b16 %v700
        %v1051 = vunpack.c.h.b16 %v700
        %v1052 = vunpack.c.l.b16 %v701
        %v1053 = vunpack.c.h.b16 %v701
        %v1054 = vunpack.c.l.b16 %v702
        %v1055 = vunpack.c.h.b16 %v702
        %v1056 = vunpack.c.l.b16 %v703
        %v1057 = vunpack.c.h.b16 %v703
        %v1058 = vunpack.c.l.b16 %v704
        %v1059 = vunpack.c.h.b16 %v704
        %v1060 = vunpack.c.l.b16 %v705
        %v1061 = vunpack.c.h.b16 %v705
        %v1062 = vunpack.c.l.b16 %v706
        %v1063 = vunpack.c.h.b16 %v706
        %v1064 = vunpack.c.l.b16 %v707
        %v1065 = vunpack.c.h.b16 %v707
        %v1066 = vunpack.c.l.b16 %v708
        %v1067 = vunpack.c.h.b16 %v708
        %v1068 = vunpack.c.l.b16 %v709
        %v1069 = vunpack.c.h.b16 %v709
        %v1070 = vunpack.c.l.b16 %v710
        %v1071 = vunpack.c.h.b16 %v710
        %v1072 = vunpack.c.l.b16 %v711
        %v1073 = vunpack.c.h.b16 %v711
        %v1074 = vunpack.c.l.b16 %v712
        %v1075 = vunpack.c.h.b16 %v712
        %v1076 = vunpack.c.l.b16 %v713
        %v1077 = vunpack.c.h.b16 %v713
        %v1078 = vunpack.c.l.b16 %v714
        %v1079 = vunpack.c.h.b16 %v714
        %v1080 = vunpack.c.l.b16 %v715
        %v1081 = vunpack.c.h.b16 %v715
        %v1082 = vunpack.c.l.b16 %v716
        %v1083 = vunpack.c.h.b16 %v716
        %v1084 = vunpack.c.l.b16 %v717
        %v1085 = vunpack.c.h.b16 %v717
        %v1086 = vunpack.c.l.b16 %v718
        %v1087 = vunpack.c.h.b16 %v718
        %v1088 = vunpack.c.l.b16 %v719
        %v1089 = vunpack.c.h.b16 %v719
        %v1090 = vunpack.c.l.b16 %v720
        %v1091 = vunpack.c.h.b16 %v720
        %v1092 = vunpack.c.l.b16 %v721
        %v1093 = vunpack.c.h.b16 %v721
        %v1094 = vunpack.c.l.b16 %v722
        %v1095 = vunpack.c.h.b16 %v722
        %v1096 = vunpack.c.l.b16 %v723
        %v1097 = vunpack.c.h.b16 %v723
        %v1098 = vunpack.c.l.b16 %v724
        %v1099 = vunpack.c.h.b16 %v724
        %v1100 = vunpack.c.l.b16 %v725
        %v1101 = vunpack.c.h.b16 %v725
        %v1102 = vunpack.c.l.b16 %v726
        %v1103 = vunpack.c.h.b16 %v726
        %v1104 = vunpack.c.l.b16 %v727
        %v1105 = vunpack.c.h.b16 %v727
        %v1106 = vunpack.c.l.b16 %v728
        %v1107 = vunpack.c.h.b16 %v728
        %v1108 = vpack.c.b16 %v872, %v868
        %v1109 = vpack.c.b16 %v873, %v869
        %v1110 = vpack.c.b16 %v874, %v870
        %v1111 = vpack.c.b16 %v875, %v871
        %v1112 = vpack.c.b16 %v880, %v876
        %v1113 = vpack.c.b16 %v881, %v877
        %v1114 = vpack.c.b16 %v882, %v878
        %v1115 = vpack.c.b16 %v883, %v879
        %v1116 = vpack.c.b16 %v888, %v884
        %v1117 = vpack.c.b16 %v889, %v885
        %v1118 = vpack.c.b16 %v890, %v886
        %v1119 = vpack.c.b16 %v891, %v887
        %v1120 = vpack.c.b16 %v896, %v892
        %v1121 = vpack.c.b16 %v897, %v893
        %v1122 = vpack.c.b16 %v898, %v894
        %v1123 = vpack.c.b16 %v899, %v895
        %v1124 = vpack.c.b16 %v904, %v900
        %v1125 = vpack.c.b16 %v905, %v901
        %v1126 = vpack.c.b16 %v906, %v902
        %v1127 = vpack.c.b16 %v907, %v903
        %v1128 = vpack.c.b16 %v912, %v908
        %v1129 = vpack.c.b16 %v913, %v909
        %v1130 = vpack.c.b16 %v914, %v910
        %v1131 = vpack.c.b16 %v915, %v911
        %v1132 = vpack.c.b16 %v920, %v916
        %v1133 = vpack.c.b16 %v921, %v917
        %v1134 = vpack.c.b16 %v922, %v918
        %v1135 = vpack.c.b16 %v923, %v919
        %v1136 = vpack.c.b16 %v928, %v924
        %v1137 = vpack.c.b16 %v929, %v925
        %v1138 = vpack.c.b16 %v930, %v926
        %v1139 = vpack.c.b16 %v931, %v927
        %v1140 = vpack.c.b16 %v936, %v932
        %v1141 = vpack.c.b16 %v937, %v933
        %v1142 = vpack.c.b16 %v938, %v934
        %v1143 = vpack.c.b16 %v939, %v935
        %v1144 = vpack.c.b16 %v944, %v940
        %v1145 = vpack.c.b16 %v945, %v941
        %v1146 = vpack.c.b16 %v946, %v942
        %v1147 = vpack.c.b16 %v947, %v943
        %v1148 = vpack.c.b16 %v952, %v948
        %v1149 = vpack.c.b16 %v953, %v949
        %v1150 = vpack.c.b16 %v954, %v950
        %v1151 = vpack.c.b16 %v955, %v951
        %v1152 = vpack.c.b16 %v960, %v956
        %v1153 = vpack.c.b16 %v961, %v957
        %v1154 = vpack.c.b16 %v962, %v958
        %v1155 = vpack.c.b16 %v963, %v959
        %v1156 = vpack.c.b16 %v968, %v964
        %v1157 = vpack.c.b16 %v969, %v965
        %v1158 = vpack.c.b16 %v970, %v966
        %v1159 = vpack.c.b16 %v971, %v967
        %v1160 = vpack.c.b16 %v976, %v972
        %v1161 = vpack.c.b16 %v977, %v973
        %v1162 = vpack.c.b16 %v978, %v974
        %v1163 = vpack.c.b16 %v979, %v975
        %v1164 = vpack.c.b16 %v984, %v980
        %v1165 = vpack.c.b16 %v985, %v981
        %v1166 = vpack.c.b16 %v986, %v982
        %v1167 = vpack.c.b16 %v987, %v983
        %v1168 = vpack.c.b16 %v992, %v988
        %v1169 = vpack.c.b16 %v993, %v989
        %v1170 = vpack.c.b16 %v994, %v990
        %v1171 = vpack.c.b16 %v995, %v991
        %v1172 = vpack.c.b16 %v1000, %v996
        %v1173 = vpack.c.b16 %v1001, %v997
        %v1174 = vpack.c.b16 %v1002, %v998
        %v1175 = vpack.c.b16 %v1003, %v999
        %v1176 = vpack.c.b16 %v1008, %v1004
        %v1177 = vpack.c.b16 %v1009, %v1005
        %v1178 = vpack.c.b16 %v1010, %v1006
        %v1179 = vpack.c.b16 %v1011, %v1007
        %v1180 = vpack.c.b16 %v1016, %v1012
        %v1181 = vpack.c.b16 %v1017, %v1013
        %v1182 = vpack.c.b16 %v1018, %v1014
        %v1183 = vpack.c.b16 %v1019, %v1015
        %v1184 = vpack.c.b16 %v1024, %v1020
        %v1185 = vpack.c.b16 %v1025, %v1021
        %v1186 = vpack.c.b16 %v1026, %v1022
        %v1187 = vpack.c.b16 %v1027, %v1023
        %v1188 = vpack.c.b16 %v1032, %v1028
        %v1189 = vpack.c.b16 %v1033, %v1029
        %v1190 = vpack.c.b16 %v1034, %v1030
        %v1191 = vpack.c.b16 %v1035, %v1031
        %v1192 = vpack.c.b16 %v1040, %v1036
        %v1193 = vpack.c.b16 %v1041, %v1037
        %v1194 = vpack.c.b16 %v1042, %v1038
        %v1195 = vpack.c.b16 %v1043, %v1039
        %v1196 = vpack.c.b16 %v1048, %v1044
        %v1197 = vpack.c.b16 %v1049, %v1045
        %v1198 = vpack.c.b16 %v1050, %v1046
        %v1199 = vpack.c.b16 %v1051, %v1047
        %v1200 = vpack.c.b16 %v1056, %v1052
        %v1201 = vpack.c.b16 %v1057, %v1053
        %v1202 = vpack.c.b16 %v1058, %v1054
        %v1203 = vpack.c.b16 %v1059, %v1055
        %v1204 = vpack.c.b16 %v1064, %v1060
        %v1205 = vpack.c.b16 %v1065, %v1061
        %v1206 = vpack.c.b16 %v1066, %v1062
        %v1207 = vpack.c.b16 %v1067, %v1063
        %v1208 = vpack.c.b16 %v1072, %v1068
        %v1209 = vpack.c.b16 %v1073, %v1069
        %v1210 = vpack.c.b16 %v1074, %v1070
        %v1211 = vpack.c.b16 %v1075, %v1071
        %v1212 = vpack.c.b16 %v1080, %v1076
        %v1213 = vpack.c.b16 %v1081, %v1077
        %v1214 = vpack.c.b16 %v1082, %v1078
        %v1215 = vpack.c.b16 %v1083, %v1079
        %v1216 = vpack.c.b16 %v1088, %v1084
        %v1217 = vpack.c.b16 %v1089, %v1085
        %v1218 = vpack.c.b16 %v1090, %v1086
        %v1219 = vpack.c.b16 %v1091, %v1087
        %v1220 = vpack.c.b16 %v1096, %v1092
        %v1221 = vpack.c.b16 %v1097, %v1093
        %v1222 = vpack.c.b16 %v1098, %v1094
        %v1223 = vpack.c.b16 %v1099, %v1095
        %v1224 = vpack.c.b16 %v1104, %v1100
        %v1225 = vpack.c.b16 %v1105, %v1101
        %v1226 = vpack.c.b16 %v1106, %v1102
        %v1227 = vpack.c.b16 %v1107, %v1103
        %vm1348 = vcmask 785408
        %v1350 = vsel %vm1348, %v744, 0
        %1352 = vmatpush.bf16.msra.mxu0 %v1136
        %1353 = vmatpush.bf16.msra.mxu0 %v1132
        %1354 = vmatpush.bf16.msra.mxu0 %v1128
        %1355 = vmatpush.bf16.msra.mxu0 %v1124
        %1356 = vmatpush.bf16.msra.mxu0 %v1120
        %1357 = vmatpush.bf16.msra.mxu0 %v1116
        %1358 = vmatpush.bf16.msra.mxu0 %v1112
        %1359 = vmatpush.bf16.msra.mxu0 %v1108
        %1360 = vmatmul.bf16.gmra.mxu0 %v741
        %v1361 = vpop.f32.mrf.mxu0
        %v1362 = vadd.f32 0.0, %v1361
        %v1363 = vpop.f32.mrf.mxu0
        %v1364 = vadd.f32 0.0, %v1363
        %1365 = vdwg.mxu0
        %1366 = vmatpush.bf16.msra.mxu0 %v1168
        %1367 = vmatpush.bf16.msra.mxu0 %v1164
        %1368 = vmatpush.bf16.msra.mxu0 %v1160
        %1369 = vmatpush.bf16.msra.mxu0 %v1156
        %1370 = vmatpush.bf16.msra.mxu0 %v1152
        %1371 = vmatpush.bf16.msra.mxu0 %v1148
        %1372 = vmatpush.bf16.msra.mxu0 %v1144
        %1373 = vmatpush.bf16.msra.mxu0 %v1140
        %1374 = vmatmul.bf16.gmra.mxu0 %v742
        %v1375 = vpop.f32.mrf.mxu0
        %v1376 = vadd.f32 %v1362, %v1375
        %v1377 = vpop.f32.mrf.mxu0
        %v1378 = vadd.f32 %v1364, %v1377
        %1379 = vdwg.mxu0
        %1380 = vmatpush.bf16.msra.mxu0 %v1200
        %1381 = vmatpush.bf16.msra.mxu0 %v1196
        %1382 = vmatpush.bf16.msra.mxu0 %v1192
        %1383 = vmatpush.bf16.msra.mxu0 %v1188
        %1384 = vmatpush.bf16.msra.mxu0 %v1184
        %1385 = vmatpush.bf16.msra.mxu0 %v1180
        %1386 = vmatpush.bf16.msra.mxu0 %v1176
        %1387 = vmatpush.bf16.msra.mxu0 %v1172
        %1388 = vmatmul.bf16.gmra.mxu0 %v743
        %v1389 = vpop.f32.mrf.mxu0
        %v1390 = vadd.f32 %v1376, %v1389
        %v1391 = vpop.f32.mrf.mxu0
        %v1392 = vadd.f32 %v1378, %v1391
        %1393 = vdwg.mxu0
        %1394 = vmatpush.bf16.msra.mxu0 0
        %1395 = vmatpush.bf16.msra.mxu0 0
        %1396 = vmatpush.bf16.msra.mxu0 %v1224
        %1397 = vmatpush.bf16.msra.mxu0 %v1220
        %1398 = vmatpush.bf16.msra.mxu0 %v1216
        %1399 = vmatpush.bf16.msra.mxu0 %v1212
        %1400 = vmatpush.bf16.msra.mxu0 %v1208
        %1401 = vmatpush.bf16.msra.mxu0 %v1204
        %1402 = vmatmul.bf16.gmra.mxu0 %v1350
        %v1403 = vpop.f32.mrf.mxu0
        %v1404 = vadd.f32 %v1390, %v1403
        %v1405 = vpop.f32.mrf.mxu0
        %v1406 = vadd.f32 %v1392, %v1405
        %1407 = vdwg.mxu0
        %1408 = vmatpush.bf16.msra.mxu0 %v1137
        %1409 = vmatpush.bf16.msra.mxu0 %v1133
        %1410 = vmatpush.bf16.msra.mxu0 %v1129
        %1411 = vmatpush.bf16.msra.mxu0 %v1125
        %1412 = vmatpush.bf16.msra.mxu0 %v1121
        %1413 = vmatpush.bf16.msra.mxu0 %v1117
        %1414 = vmatpush.bf16.msra.mxu0 %v1113
        %1415 = vmatpush.bf16.msra.mxu0 %v1109
        %1416 = vmatmul.bf16.gmra.mxu0 %v741
        %v1417 = vpop.f32.mrf.mxu0
        %v1418 = vadd.f32 0.0, %v1417
        %v1419 = vpop.f32.mrf.mxu0
        %v1420 = vadd.f32 0.0, %v1419
        %1421 = vdwg.mxu0
        %1422 = vmatpush.bf16.msra.mxu0 %v1169
        %1423 = vmatpush.bf16.msra.mxu0 %v1165
        %1424 = vmatpush.bf16.msra.mxu0 %v1161
        %1425 = vmatpush.bf16.msra.mxu0 %v1157
        %1426 = vmatpush.bf16.msra.mxu0 %v1153
        %1427 = vmatpush.bf16.msra.mxu0 %v1149
        %1428 = vmatpush.bf16.msra.mxu0 %v1145
        %1429 = vmatpush.bf16.msra.mxu0 %v1141
        %1430 = vmatmul.bf16.gmra.mxu0 %v742
        %v1431 = vpop.f32.mrf.mxu0
        %v1432 = vadd.f32 %v1418, %v1431
        %v1433 = vpop.f32.mrf.mxu0
        %v1434 = vadd.f32 %v1420, %v1433
        %1435 = vdwg.mxu0
        %1436 = vmatpush.bf16.msra.mxu0 %v1201
        %1437 = vmatpush.bf16.msra.mxu0 %v1197
        %1438 = vmatpush.bf16.msra.mxu0 %v1193
        %1439 = vmatpush.bf16.msra.mxu0 %v1189
        %1440 = vmatpush.bf16.msra.mxu0 %v1185
        %1441 = vmatpush.bf16.msra.mxu0 %v1181
        %1442 = vmatpush.bf16.msra.mxu0 %v1177
        %1443 = vmatpush.bf16.msra.mxu0 %v1173
        %1444 = vmatmul.bf16.gmra.mxu0 %v743
        %v1445 = vpop.f32.mrf.mxu0
        %v1446 = vadd.f32 %v1432, %v1445
        %v1447 = vpop.f32.mrf.mxu0
        %v1448 = vadd.f32 %v1434, %v1447
        %1449 = vdwg.mxu0
        %1450 = vmatpush.bf16.msra.mxu0 0
        %1451 = vmatpush.bf16.msra.mxu0 0
        %1452 = vmatpush.bf16.msra.mxu0 %v1225
        %1453 = vmatpush.bf16.msra.mxu0 %v1221
        %1454 = vmatpush.bf16.msra.mxu0 %v1217
        %1455 = vmatpush.bf16.msra.mxu0 %v1213
        %1456 = vmatpush.bf16.msra.mxu0 %v1209
        %1457 = vmatpush.bf16.msra.mxu0 %v1205
        %1458 = vmatmul.bf16.gmra.mxu0 %v1350
        %v1459 = vpop.f32.mrf.mxu0
        %v1460 = vadd.f32 %v1446, %v1459
        %v1461 = vpop.f32.mrf.mxu0
        %v1462 = vadd.f32 %v1448, %v1461
        %1463 = vdwg.mxu0
        %1464 = vmatpush.bf16.msra.mxu0 %v1138
        %1465 = vmatpush.bf16.msra.mxu0 %v1134
        %1466 = vmatpush.bf16.msra.mxu0 %v1130
        %1467 = vmatpush.bf16.msra.mxu0 %v1126
        %1468 = vmatpush.bf16.msra.mxu0 %v1122
        %1469 = vmatpush.bf16.msra.mxu0 %v1118
        %1470 = vmatpush.bf16.msra.mxu0 %v1114
        %1471 = vmatpush.bf16.msra.mxu0 %v1110
        %1472 = vmatmul.bf16.gmra.mxu0 %v741
        %v1473 = vpop.f32.mrf.mxu0
        %v1474 = vadd.f32 0.0, %v1473
        %v1475 = vpop.f32.mrf.mxu0
        %v1476 = vadd.f32 0.0, %v1475
        %1477 = vdwg.mxu0
        %1478 = vmatpush.bf16.msra.mxu0 %v1170
        %1479 = vmatpush.bf16.msra.mxu0 %v1166
        %1480 = vmatpush.bf16.msra.mxu0 %v1162
        %1481 = vmatpush.bf16.msra.mxu0 %v1158
        %1482 = vmatpush.bf16.msra.mxu0 %v1154
        %1483 = vmatpush.bf16.msra.mxu0 %v1150
        %1484 = vmatpush.bf16.msra.mxu0 %v1146
        %1485 = vmatpush.bf16.msra.mxu0 %v1142
        %1486 = vmatmul.bf16.gmra.mxu0 %v742
        %v1487 = vpop.f32.mrf.mxu0
        %v1488 = vadd.f32 %v1474, %v1487
        %v1489 = vpop.f32.mrf.mxu0
        %v1490 = vadd.f32 %v1476, %v1489
        %1491 = vdwg.mxu0
        %1492 = vmatpush.bf16.msra.mxu0 %v1202
        %1493 = vmatpush.bf16.msra.mxu0 %v1198
        %1494 = vmatpush.bf16.msra.mxu0 %v1194
        %1495 = vmatpush.bf16.msra.mxu0 %v1190
        %1496 = vmatpush.bf16.msra.mxu0 %v1186
        %1497 = vmatpush.bf16.msra.mxu0 %v1182
        %1498 = vmatpush.bf16.msra.mxu0 %v1178
        %1499 = vmatpush.bf16.msra.mxu0 %v1174
        %1500 = vmatmul.bf16.gmra.mxu0 %v743
        %v1501 = vpop.f32.mrf.mxu0
        %v1502 = vadd.f32 %v1488, %v1501
        %v1503 = vpop.f32.mrf.mxu0
        %v1504 = vadd.f32 %v1490, %v1503
        %1505 = vdwg.mxu0
        %1506 = vmatpush.bf16.msra.mxu0 0
        %1507 = vmatpush.bf16.msra.mxu0 0
        %1508 = vmatpush.bf16.msra.mxu0 %v1226
        %1509 = vmatpush.bf16.msra.mxu0 %v1222
        %1510 = vmatpush.bf16.msra.mxu0 %v1218
        %1511 = vmatpush.bf16.msra.mxu0 %v1214
        %1512 = vmatpush.bf16.msra.mxu0 %v1210
        %1513 = vmatpush.bf16.msra.mxu0 %v1206
        %1514 = vmatmul.bf16.gmra.mxu0 %v1350
        %v1515 = vpop.f32.mrf.mxu0
        %v1516 = vadd.f32 %v1502, %v1515
        %v1517 = vpop.f32.mrf.mxu0
        %v1518 = vadd.f32 %v1504, %v1517
        %1519 = vdwg.mxu0
        %1520 = vmatpush.bf16.msra.mxu0 %v1139
        %1521 = vmatpush.bf16.msra.mxu0 %v1135
        %1522 = vmatpush.bf16.msra.mxu0 %v1131
        %1523 = vmatpush.bf16.msra.mxu0 %v1127
        %1524 = vmatpush.bf16.msra.mxu0 %v1123
        %1525 = vmatpush.bf16.msra.mxu0 %v1119
        %1526 = vmatpush.bf16.msra.mxu0 %v1115
        %1527 = vmatpush.bf16.msra.mxu0 %v1111
        %1528 = vmatmul.bf16.gmra.mxu0 %v741
        %v1529 = vpop.f32.mrf.mxu0
        %v1530 = vadd.f32 0.0, %v1529
        %v1531 = vpop.f32.mrf.mxu0
        %v1532 = vadd.f32 0.0, %v1531
        %1533 = vdwg.mxu0
        %1534 = vmatpush.bf16.msra.mxu0 %v1171
        %1535 = vmatpush.bf16.msra.mxu0 %v1167
        %1536 = vmatpush.bf16.msra.mxu0 %v1163
        %1537 = vmatpush.bf16.msra.mxu0 %v1159
        %1538 = vmatpush.bf16.msra.mxu0 %v1155
        %1539 = vmatpush.bf16.msra.mxu0 %v1151
        %1540 = vmatpush.bf16.msra.mxu0 %v1147
        %1541 = vmatpush.bf16.msra.mxu0 %v1143
        %1542 = vmatmul.bf16.gmra.mxu0 %v742
        %v1543 = vpop.f32.mrf.mxu0
        %v1544 = vadd.f32 %v1530, %v1543
        %v1545 = vpop.f32.mrf.mxu0
        %v1546 = vadd.f32 %v1532, %v1545
        %1547 = vdwg.mxu0
        %1548 = vmatpush.bf16.msra.mxu0 %v1203
        %1549 = vmatpush.bf16.msra.mxu0 %v1199
        %1550 = vmatpush.bf16.msra.mxu0 %v1195
        %1551 = vmatpush.bf16.msra.mxu0 %v1191
        %1552 = vmatpush.bf16.msra.mxu0 %v1187
        %1553 = vmatpush.bf16.msra.mxu0 %v1183
        %1554 = vmatpush.bf16.msra.mxu0 %v1179
        %1555 = vmatpush.bf16.msra.mxu0 %v1175
        %1556 = vmatmul.bf16.gmra.mxu0 %v743
        %v1557 = vpop.f32.mrf.mxu0
        %v1558 = vadd.f32 %v1544, %v1557
        %v1559 = vpop.f32.mrf.mxu0
        %v1560 = vadd.f32 %v1546, %v1559
        %1561 = vdwg.mxu0
        %1562 = vmatpush.bf16.msra.mxu0 0
        %1563 = vmatpush.bf16.msra.mxu0 0
        %1564 = vmatpush.bf16.msra.mxu0 %v1227
        %1565 = vmatpush.bf16.msra.mxu0 %v1223
        %1566 = vmatpush.bf16.msra.mxu0 %v1219
        %1567 = vmatpush.bf16.msra.mxu0 %v1215
        %1568 = vmatpush.bf16.msra.mxu0 %v1211
        %1569 = vmatpush.bf16.msra.mxu0 %v1207
        %1570 = vmatmul.bf16.gmra.mxu0 %v1350
        %v1571 = vpop.f32.mrf.mxu0
        %v1572 = vadd.f32 %v1558, %v1571
        %v1573 = vpop.f32.mrf.mxu0
        %v1574 = vadd.f32 %v1560, %v1573
        %1575 = vdwg.mxu0
        %v1696 = vunpack.c.l.b16 %v489
        %v1697 = vunpack.c.h.b16 %v489
        %v1698 = vunpack.c.l.b16 %v490
        %v1699 = vunpack.c.h.b16 %v490
        %v1700 = vunpack.c.l.b16 %v491
        %v1701 = vunpack.c.h.b16 %v491
        %v1702 = vunpack.c.l.b16 %v492
        %v1703 = vunpack.c.h.b16 %v492
        %v1704 = vunpack.c.l.b16 %v493
        %v1705 = vunpack.c.h.b16 %v493
        %v1706 = vunpack.c.l.b16 %v494
        %v1707 = vunpack.c.h.b16 %v494
        %v1708 = vunpack.c.l.b16 %v495
        %v1709 = vunpack.c.h.b16 %v495
        %v1710 = vunpack.c.l.b16 %v496
        %v1711 = vunpack.c.h.b16 %v496
        %v1712 = vunpack.c.l.b16 %v497
        %v1713 = vunpack.c.h.b16 %v497
        %v1714 = vunpack.c.l.b16 %v498
        %v1715 = vunpack.c.h.b16 %v498
        %v1716 = vunpack.c.l.b16 %v499
        %v1717 = vunpack.c.h.b16 %v499
        %v1718 = vunpack.c.l.b16 %v500
        %v1719 = vunpack.c.h.b16 %v500
        %v1720 = vunpack.c.l.b16 %v501
        %v1721 = vunpack.c.h.b16 %v501
        %v1722 = vunpack.c.l.b16 %v502
        %v1723 = vunpack.c.h.b16 %v502
        %v1724 = vunpack.c.l.b16 %v503
        %v1725 = vunpack.c.h.b16 %v503
        %v1726 = vunpack.c.l.b16 %v504
        %v1727 = vunpack.c.h.b16 %v504
        %v1728 = vunpack.c.l.b16 %v505
        %v1729 = vunpack.c.h.b16 %v505
        %v1730 = vunpack.c.l.b16 %v506
        %v1731 = vunpack.c.h.b16 %v506
        %v1732 = vunpack.c.l.b16 %v507
        %v1733 = vunpack.c.h.b16 %v507
        %v1734 = vunpack.c.l.b16 %v508
        %v1735 = vunpack.c.h.b16 %v508
        %v1736 = vunpack.c.l.b16 %v509
        %v1737 = vunpack.c.h.b16 %v509
        %v1738 = vunpack.c.l.b16 %v510
        %v1739 = vunpack.c.h.b16 %v510
        %v1740 = vunpack.c.l.b16 %v511
        %v1741 = vunpack.c.h.b16 %v511
        %v1742 = vunpack.c.l.b16 %v512
        %v1743 = vunpack.c.h.b16 %v512
        %v1744 = vunpack.c.l.b16 %v513
        %v1745 = vunpack.c.h.b16 %v513
        %v1746 = vunpack.c.l.b16 %v514
        %v1747 = vunpack.c.h.b16 %v514
        %v1748 = vunpack.c.l.b16 %v515
        %v1749 = vunpack.c.h.b16 %v515
        %v1750 = vunpack.c.l.b16 %v516
        %v1751 = vunpack.c.h.b16 %v516
        %v1752 = vunpack.c.l.b16 %v517
        %v1753 = vunpack.c.h.b16 %v517
        %v1754 = vunpack.c.l.b16 %v518
        %v1755 = vunpack.c.h.b16 %v518
        %v1756 = vunpack.c.l.b16 %v519
        %v1757 = vunpack.c.h.b16 %v519
        %v1758 = vunpack.c.l.b16 %v520
        %v1759 = vunpack.c.h.b16 %v520
        %v1760 = vunpack.c.l.b16 %v521
        %v1761 = vunpack.c.h.b16 %v521
        %v1762 = vunpack.c.l.b16 %v522
        %v1763 = vunpack.c.h.b16 %v522
        %v1764 = vunpack.c.l.b16 %v523
        %v1765 = vunpack.c.h.b16 %v523
        %v1766 = vunpack.c.l.b16 %v524
        %v1767 = vunpack.c.h.b16 %v524
        %v1768 = vunpack.c.l.b16 %v525
        %v1769 = vunpack.c.h.b16 %v525
        %v1770 = vunpack.c.l.b16 %v526
        %v1771 = vunpack.c.h.b16 %v526
        %v1772 = vunpack.c.l.b16 %v527
        %v1773 = vunpack.c.h.b16 %v527
        %v1774 = vunpack.c.l.b16 %v528
        %v1775 = vunpack.c.h.b16 %v528
        %v1776 = vunpack.c.l.b16 %v529
        %v1777 = vunpack.c.h.b16 %v529
        %v1778 = vunpack.c.l.b16 %v530
        %v1779 = vunpack.c.h.b16 %v530
        %v1780 = vunpack.c.l.b16 %v531
        %v1781 = vunpack.c.h.b16 %v531
        %v1782 = vunpack.c.l.b16 %v532
        %v1783 = vunpack.c.h.b16 %v532
        %v1784 = vunpack.c.l.b16 %v533
        %v1785 = vunpack.c.h.b16 %v533
        %v1786 = vunpack.c.l.b16 %v534
        %v1787 = vunpack.c.h.b16 %v534
        %v1788 = vunpack.c.l.b16 %v535
        %v1789 = vunpack.c.h.b16 %v535
        %v1790 = vunpack.c.l.b16 %v536
        %v1791 = vunpack.c.h.b16 %v536
        %v1792 = vunpack.c.l.b16 %v537
        %v1793 = vunpack.c.h.b16 %v537
        %v1794 = vunpack.c.l.b16 %v538
        %v1795 = vunpack.c.h.b16 %v538
        %v1796 = vunpack.c.l.b16 %v539
        %v1797 = vunpack.c.h.b16 %v539
        %v1798 = vunpack.c.l.b16 %v540
        %v1799 = vunpack.c.h.b16 %v540
        %v1800 = vunpack.c.l.b16 %v541
        %v1801 = vunpack.c.h.b16 %v541
        %v1802 = vunpack.c.l.b16 %v542
        %v1803 = vunpack.c.h.b16 %v542
        %v1804 = vunpack.c.l.b16 %v543
        %v1805 = vunpack.c.h.b16 %v543
        %v1806 = vunpack.c.l.b16 %v544
        %v1807 = vunpack.c.h.b16 %v544
        %v1808 = vunpack.c.l.b16 %v545
        %v1809 = vunpack.c.h.b16 %v545
        %v1810 = vunpack.c.l.b16 %v546
        %v1811 = vunpack.c.h.b16 %v546
        %v1812 = vunpack.c.l.b16 %v547
        %v1813 = vunpack.c.h.b16 %v547
        %v1814 = vunpack.c.l.b16 %v548
        %v1815 = vunpack.c.h.b16 %v548
        %v1816 = vunpack.c.l.b16 %v549
        %v1817 = vunpack.c.h.b16 %v549
        %v1818 = vunpack.c.l.b16 %v550
        %v1819 = vunpack.c.h.b16 %v550
        %v1820 = vunpack.c.l.b16 %v551
        %v1821 = vunpack.c.h.b16 %v551
        %v1822 = vunpack.c.l.b16 %v552
        %v1823 = vunpack.c.h.b16 %v552
        %v1824 = vunpack.c.l.b16 %v553
        %v1825 = vunpack.c.h.b16 %v553
        %v1826 = vunpack.c.l.b16 %v554
        %v1827 = vunpack.c.h.b16 %v554
        %v1828 = vunpack.c.l.b16 %v555
        %v1829 = vunpack.c.h.b16 %v555
        %v1830 = vunpack.c.l.b16 %v556
        %v1831 = vunpack.c.h.b16 %v556
        %v1832 = vunpack.c.l.b16 %v557
        %v1833 = vunpack.c.h.b16 %v557
        %v1834 = vunpack.c.l.b16 %v558
        %v1835 = vunpack.c.h.b16 %v558
        %v1836 = vunpack.c.l.b16 %v559
        %v1837 = vunpack.c.h.b16 %v559
        %v1838 = vunpack.c.l.b16 %v560
        %v1839 = vunpack.c.h.b16 %v560
        %v1840 = vunpack.c.l.b16 %v561
        %v1841 = vunpack.c.h.b16 %v561
        %v1842 = vunpack.c.l.b16 %v562
        %v1843 = vunpack.c.h.b16 %v562
        %v1844 = vunpack.c.l.b16 %v563
        %v1845 = vunpack.c.h.b16 %v563
        %v1846 = vunpack.c.l.b16 %v564
        %v1847 = vunpack.c.h.b16 %v564
        %v1848 = vunpack.c.l.b16 %v565
        %v1849 = vunpack.c.h.b16 %v565
        %v1850 = vunpack.c.l.b16 %v566
        %v1851 = vunpack.c.h.b16 %v566
        %v1852 = vunpack.c.l.b16 %v567
        %v1853 = vunpack.c.h.b16 %v567
        %v1854 = vunpack.c.l.b16 %v568
        %v1855 = vunpack.c.h.b16 %v568
        %v1856 = vunpack.c.l.b16 %v569
        %v1857 = vunpack.c.h.b16 %v569
        %v1858 = vunpack.c.l.b16 %v570
        %v1859 = vunpack.c.h.b16 %v570
        %v1860 = vunpack.c.l.b16 %v571
        %v1861 = vunpack.c.h.b16 %v571
        %v1862 = vunpack.c.l.b16 %v572
        %v1863 = vunpack.c.h.b16 %v572
        %v1864 = vunpack.c.l.b16 %v573
        %v1865 = vunpack.c.h.b16 %v573
        %v1866 = vunpack.c.l.b16 %v574
        %v1867 = vunpack.c.h.b16 %v574
        %v1868 = vunpack.c.l.b16 %v575
        %v1869 = vunpack.c.h.b16 %v575
        %v1870 = vunpack.c.l.b16 %v576
        %v1871 = vunpack.c.h.b16 %v576
        %v1872 = vunpack.c.l.b16 %v577
        %v1873 = vunpack.c.h.b16 %v577
        %v1874 = vunpack.c.l.b16 %v578
        %v1875 = vunpack.c.h.b16 %v578
        %v1876 = vunpack.c.l.b16 %v579
        %v1877 = vunpack.c.h.b16 %v579
        %v1878 = vunpack.c.l.b16 %v580
        %v1879 = vunpack.c.h.b16 %v580
        %v1880 = vunpack.c.l.b16 %v581
        %v1881 = vunpack.c.h.b16 %v581
        %v1882 = vunpack.c.l.b16 %v582
        %v1883 = vunpack.c.h.b16 %v582
        %v1884 = vunpack.c.l.b16 %v583
        %v1885 = vunpack.c.h.b16 %v583
        %v1886 = vunpack.c.l.b16 %v584
        %v1887 = vunpack.c.h.b16 %v584
        %v1888 = vunpack.c.l.b16 %v585
        %v1889 = vunpack.c.h.b16 %v585
        %v1890 = vunpack.c.l.b16 %v586
        %v1891 = vunpack.c.h.b16 %v586
        %v1892 = vunpack.c.l.b16 %v587
        %v1893 = vunpack.c.h.b16 %v587
        %v1894 = vunpack.c.l.b16 %v588
        %v1895 = vunpack.c.h.b16 %v588
        %v1896 = vunpack.c.l.b16 %v589
        %v1897 = vunpack.c.h.b16 %v589
        %v1898 = vunpack.c.l.b16 %v590
        %v1899 = vunpack.c.h.b16 %v590
        %v1900 = vunpack.c.l.b16 %v591
        %v1901 = vunpack.c.h.b16 %v591
        %v1902 = vunpack.c.l.b16 %v592
        %v1903 = vunpack.c.h.b16 %v592
        %v1904 = vunpack.c.l.b16 %v593
        %v1905 = vunpack.c.h.b16 %v593
        %v1906 = vunpack.c.l.b16 %v594
        %v1907 = vunpack.c.h.b16 %v594
        %v1908 = vunpack.c.l.b16 %v595
        %v1909 = vunpack.c.h.b16 %v595
        %v1910 = vunpack.c.l.b16 %v596
        %v1911 = vunpack.c.h.b16 %v596
        %v1912 = vunpack.c.l.b16 %v597
        %v1913 = vunpack.c.h.b16 %v597
        %v1914 = vunpack.c.l.b16 %v598
        %v1915 = vunpack.c.h.b16 %v598
        %v1916 = vunpack.c.l.b16 %v599
        %v1917 = vunpack.c.h.b16 %v599
        %v1918 = vunpack.c.l.b16 %v600
        %v1919 = vunpack.c.h.b16 %v600
        %v1920 = vunpack.c.l.b16 %v601
        %v1921 = vunpack.c.h.b16 %v601
        %v1922 = vunpack.c.l.b16 %v602
        %v1923 = vunpack.c.h.b16 %v602
        %v1924 = vunpack.c.l.b16 %v603
        %v1925 = vunpack.c.h.b16 %v603
        %v1926 = vunpack.c.l.b16 %v604
        %v1927 = vunpack.c.h.b16 %v604
        %v1928 = vunpack.c.l.b16 %v605
        %v1929 = vunpack.c.h.b16 %v605
        %v1930 = vunpack.c.l.b16 %v606
        %v1931 = vunpack.c.h.b16 %v606
        %v1932 = vunpack.c.l.b16 %v607
        %v1933 = vunpack.c.h.b16 %v607
        %v1934 = vunpack.c.l.b16 %v608
        %v1935 = vunpack.c.h.b16 %v608
        %v1936 = vpack.c.b16 %v1700, %v1696
        %v1937 = vpack.c.b16 %v1701, %v1697
        %v1938 = vpack.c.b16 %v1702, %v1698
        %v1939 = vpack.c.b16 %v1703, %v1699
        %v1940 = vpack.c.b16 %v1708, %v1704
        %v1941 = vpack.c.b16 %v1709, %v1705
        %v1942 = vpack.c.b16 %v1710, %v1706
        %v1943 = vpack.c.b16 %v1711, %v1707
        %v1944 = vpack.c.b16 %v1716, %v1712
        %v1945 = vpack.c.b16 %v1717, %v1713
        %v1946 = vpack.c.b16 %v1718, %v1714
        %v1947 = vpack.c.b16 %v1719, %v1715
        %v1948 = vpack.c.b16 %v1724, %v1720
        %v1949 = vpack.c.b16 %v1725, %v1721
        %v1950 = vpack.c.b16 %v1726, %v1722
        %v1951 = vpack.c.b16 %v1727, %v1723
        %v1952 = vpack.c.b16 %v1732, %v1728
        %v1953 = vpack.c.b16 %v1733, %v1729
        %v1954 = vpack.c.b16 %v1734, %v1730
        %v1955 = vpack.c.b16 %v1735, %v1731
        %v1956 = vpack.c.b16 %v1740, %v1736
        %v1957 = vpack.c.b16 %v1741, %v1737
        %v1958 = vpack.c.b16 %v1742, %v1738
        %v1959 = vpack.c.b16 %v1743, %v1739
        %v1960 = vpack.c.b16 %v1748, %v1744
        %v1961 = vpack.c.b16 %v1749, %v1745
        %v1962 = vpack.c.b16 %v1750, %v1746
        %v1963 = vpack.c.b16 %v1751, %v1747
        %v1964 = vpack.c.b16 %v1756, %v1752
        %v1965 = vpack.c.b16 %v1757, %v1753
        %v1966 = vpack.c.b16 %v1758, %v1754
        %v1967 = vpack.c.b16 %v1759, %v1755
        %v1968 = vpack.c.b16 %v1764, %v1760
        %v1969 = vpack.c.b16 %v1765, %v1761
        %v1970 = vpack.c.b16 %v1766, %v1762
        %v1971 = vpack.c.b16 %v1767, %v1763
        %v1972 = vpack.c.b16 %v1772, %v1768
        %v1973 = vpack.c.b16 %v1773, %v1769
        %v1974 = vpack.c.b16 %v1774, %v1770
        %v1975 = vpack.c.b16 %v1775, %v1771
        %v1976 = vpack.c.b16 %v1780, %v1776
        %v1977 = vpack.c.b16 %v1781, %v1777
        %v1978 = vpack.c.b16 %v1782, %v1778
        %v1979 = vpack.c.b16 %v1783, %v1779
        %v1980 = vpack.c.b16 %v1788, %v1784
        %v1981 = vpack.c.b16 %v1789, %v1785
        %v1982 = vpack.c.b16 %v1790, %v1786
        %v1983 = vpack.c.b16 %v1791, %v1787
        %v1984 = vpack.c.b16 %v1796, %v1792
        %v1985 = vpack.c.b16 %v1797, %v1793
        %v1986 = vpack.c.b16 %v1798, %v1794
        %v1987 = vpack.c.b16 %v1799, %v1795
        %v1988 = vpack.c.b16 %v1804, %v1800
        %v1989 = vpack.c.b16 %v1805, %v1801
        %v1990 = vpack.c.b16 %v1806, %v1802
        %v1991 = vpack.c.b16 %v1807, %v1803
        %v1992 = vpack.c.b16 %v1812, %v1808
        %v1993 = vpack.c.b16 %v1813, %v1809
        %v1994 = vpack.c.b16 %v1814, %v1810
        %v1995 = vpack.c.b16 %v1815, %v1811
        %v1996 = vpack.c.b16 %v1820, %v1816
        %v1997 = vpack.c.b16 %v1821, %v1817
        %v1998 = vpack.c.b16 %v1822, %v1818
        %v1999 = vpack.c.b16 %v1823, %v1819
        %v2000 = vpack.c.b16 %v1828, %v1824
        %v2001 = vpack.c.b16 %v1829, %v1825
        %v2002 = vpack.c.b16 %v1830, %v1826
        %v2003 = vpack.c.b16 %v1831, %v1827
        %v2004 = vpack.c.b16 %v1836, %v1832
        %v2005 = vpack.c.b16 %v1837, %v1833
        %v2006 = vpack.c.b16 %v1838, %v1834
        %v2007 = vpack.c.b16 %v1839, %v1835
        %v2008 = vpack.c.b16 %v1844, %v1840
        %v2009 = vpack.c.b16 %v1845, %v1841
        %v2010 = vpack.c.b16 %v1846, %v1842
        %v2011 = vpack.c.b16 %v1847, %v1843
        %v2012 = vpack.c.b16 %v1852, %v1848
        %v2013 = vpack.c.b16 %v1853, %v1849
        %v2014 = vpack.c.b16 %v1854, %v1850
        %v2015 = vpack.c.b16 %v1855, %v1851
        %v2016 = vpack.c.b16 %v1860, %v1856
        %v2017 = vpack.c.b16 %v1861, %v1857
        %v2018 = vpack.c.b16 %v1862, %v1858
        %v2019 = vpack.c.b16 %v1863, %v1859
        %v2020 = vpack.c.b16 %v1868, %v1864
        %v2021 = vpack.c.b16 %v1869, %v1865
        %v2022 = vpack.c.b16 %v1870, %v1866
        %v2023 = vpack.c.b16 %v1871, %v1867
        %v2024 = vpack.c.b16 %v1876, %v1872
        %v2025 = vpack.c.b16 %v1877, %v1873
        %v2026 = vpack.c.b16 %v1878, %v1874
        %v2027 = vpack.c.b16 %v1879, %v1875
        %v2028 = vpack.c.b16 %v1884, %v1880
        %v2029 = vpack.c.b16 %v1885, %v1881
        %v2030 = vpack.c.b16 %v1886, %v1882
        %v2031 = vpack.c.b16 %v1887, %v1883
        %v2032 = vpack.c.b16 %v1892, %v1888
        %v2033 = vpack.c.b16 %v1893, %v1889
        %v2034 = vpack.c.b16 %v1894, %v1890
        %v2035 = vpack.c.b16 %v1895, %v1891
        %v2036 = vpack.c.b16 %v1900, %v1896
        %v2037 = vpack.c.b16 %v1901, %v1897
        %v2038 = vpack.c.b16 %v1902, %v1898
        %v2039 = vpack.c.b16 %v1903, %v1899
        %v2040 = vpack.c.b16 %v1908, %v1904
        %v2041 = vpack.c.b16 %v1909, %v1905
        %v2042 = vpack.c.b16 %v1910, %v1906
        %v2043 = vpack.c.b16 %v1911, %v1907
        %v2044 = vpack.c.b16 %v1916, %v1912
        %v2045 = vpack.c.b16 %v1917, %v1913
        %v2046 = vpack.c.b16 %v1918, %v1914
        %v2047 = vpack.c.b16 %v1919, %v1915
        %v2048 = vpack.c.b16 %v1924, %v1920
        %v2049 = vpack.c.b16 %v1925, %v1921
        %v2050 = vpack.c.b16 %v1926, %v1922
        %v2051 = vpack.c.b16 %v1927, %v1923
        %v2052 = vpack.c.b16 %v1932, %v1928
        %v2053 = vpack.c.b16 %v1933, %v1929
        %v2054 = vpack.c.b16 %v1934, %v1930
        %v2055 = vpack.c.b16 %v1935, %v1931
        %2176 = vmatpush.bf16.msra.mxu0 %v1964
        %2177 = vmatpush.bf16.msra.mxu0 %v1960
        %2178 = vmatpush.bf16.msra.mxu0 %v1956
        %2179 = vmatpush.bf16.msra.mxu0 %v1952
        %2180 = vmatpush.bf16.msra.mxu0 %v1948
        %2181 = vmatpush.bf16.msra.mxu0 %v1944
        %2182 = vmatpush.bf16.msra.mxu0 %v1940
        %2183 = vmatpush.bf16.msra.mxu0 %v1936
        %2184 = vmatmul.bf16.gmra.mxu0 %v741
        %v2185 = vpop.f32.mrf.mxu0
        %v2186 = vadd.f32 %v1404, %v2185
        %v2187 = vpop.f32.mrf.mxu0
        %v2188 = vadd.f32 %v1406, %v2187
        %2189 = vdwg.mxu0
        %2190 = vmatpush.bf16.msra.mxu0 %v1996
        %2191 = vmatpush.bf16.msra.mxu0 %v1992
        %2192 = vmatpush.bf16.msra.mxu0 %v1988
        %2193 = vmatpush.bf16.msra.mxu0 %v1984
        %2194 = vmatpush.bf16.msra.mxu0 %v1980
        %2195 = vmatpush.bf16.msra.mxu0 %v1976
        %2196 = vmatpush.bf16.msra.mxu0 %v1972
        %2197 = vmatpush.bf16.msra.mxu0 %v1968
        %2198 = vmatmul.bf16.gmra.mxu0 %v742
        %v2199 = vpop.f32.mrf.mxu0
        %v2200 = vadd.f32 %v2186, %v2199
        %v2201 = vpop.f32.mrf.mxu0
        %v2202 = vadd.f32 %v2188, %v2201
        %2203 = vdwg.mxu0
        %2204 = vmatpush.bf16.msra.mxu0 %v2028
        %2205 = vmatpush.bf16.msra.mxu0 %v2024
        %2206 = vmatpush.bf16.msra.mxu0 %v2020
        %2207 = vmatpush.bf16.msra.mxu0 %v2016
        %2208 = vmatpush.bf16.msra.mxu0 %v2012
        %2209 = vmatpush.bf16.msra.mxu0 %v2008
        %2210 = vmatpush.bf16.msra.mxu0 %v2004
        %2211 = vmatpush.bf16.msra.mxu0 %v2000
        %2212 = vmatmul.bf16.gmra.mxu0 %v743
        %v2213 = vpop.f32.mrf.mxu0
        %v2214 = vadd.f32 %v2200, %v2213
        %v2215 = vpop.f32.mrf.mxu0
        %v2216 = vadd.f32 %v2202, %v2215
        %2217 = vdwg.mxu0
        %2218 = vmatpush.bf16.msra.mxu0 0
        %2219 = vmatpush.bf16.msra.mxu0 0
        %2220 = vmatpush.bf16.msra.mxu0 %v2052
        %2221 = vmatpush.bf16.msra.mxu0 %v2048
        %2222 = vmatpush.bf16.msra.mxu0 %v2044
        %2223 = vmatpush.bf16.msra.mxu0 %v2040
        %2224 = vmatpush.bf16.msra.mxu0 %v2036
        %2225 = vmatpush.bf16.msra.mxu0 %v2032
        %2226 = vmatmul.bf16.gmra.mxu0 %v1350
        %v2227 = vpop.f32.mrf.mxu0
        %v2228 = vadd.f32 %v2214, %v2227
        %v2229 = vpop.f32.mrf.mxu0
        %v2230 = vadd.f32 %v2216, %v2229
        %2231 = vdwg.mxu0
        %2232 = vmatpush.bf16.msra.mxu0 %v1965
        %2233 = vmatpush.bf16.msra.mxu0 %v1961
        %2234 = vmatpush.bf16.msra.mxu0 %v1957
        %2235 = vmatpush.bf16.msra.mxu0 %v1953
        %2236 = vmatpush.bf16.msra.mxu0 %v1949
        %2237 = vmatpush.bf16.msra.mxu0 %v1945
        %2238 = vmatpush.bf16.msra.mxu0 %v1941
        %2239 = vmatpush.bf16.msra.mxu0 %v1937
        %2240 = vmatmul.bf16.gmra.mxu0 %v741
        %v2241 = vpop.f32.mrf.mxu0
        %v2242 = vadd.f32 %v1460, %v2241
        %v2243 = vpop.f32.mrf.mxu0
        %v2244 = vadd.f32 %v1462, %v2243
        %2245 = vdwg.mxu0
        %2246 = vmatpush.bf16.msra.mxu0 %v1997
        %2247 = vmatpush.bf16.msra.mxu0 %v1993
        %2248 = vmatpush.bf16.msra.mxu0 %v1989
        %2249 = vmatpush.bf16.msra.mxu0 %v1985
        %2250 = vmatpush.bf16.msra.mxu0 %v1981
        %2251 = vmatpush.bf16.msra.mxu0 %v1977
        %2252 = vmatpush.bf16.msra.mxu0 %v1973
        %2253 = vmatpush.bf16.msra.mxu0 %v1969
        %2254 = vmatmul.bf16.gmra.mxu0 %v742
        %v2255 = vpop.f32.mrf.mxu0
        %v2256 = vadd.f32 %v2242, %v2255
        %v2257 = vpop.f32.mrf.mxu0
        %v2258 = vadd.f32 %v2244, %v2257
        %2259 = vdwg.mxu0
        %2260 = vmatpush.bf16.msra.mxu0 %v2029
        %2261 = vmatpush.bf16.msra.mxu0 %v2025
        %2262 = vmatpush.bf16.msra.mxu0 %v2021
        %2263 = vmatpush.bf16.msra.mxu0 %v2017
        %2264 = vmatpush.bf16.msra.mxu0 %v2013
        %2265 = vmatpush.bf16.msra.mxu0 %v2009
        %2266 = vmatpush.bf16.msra.mxu0 %v2005
        %2267 = vmatpush.bf16.msra.mxu0 %v2001
        %2268 = vmatmul.bf16.gmra.mxu0 %v743
        %v2269 = vpop.f32.mrf.mxu0
        %v2270 = vadd.f32 %v2256, %v2269
        %v2271 = vpop.f32.mrf.mxu0
        %v2272 = vadd.f32 %v2258, %v2271
        %2273 = vdwg.mxu0
        %2274 = vmatpush.bf16.msra.mxu0 0
        %2275 = vmatpush.bf16.msra.mxu0 0
        %2276 = vmatpush.bf16.msra.mxu0 %v2053
        %2277 = vmatpush.bf16.msra.mxu0 %v2049
        %2278 = vmatpush.bf16.msra.mxu0 %v2045
        %2279 = vmatpush.bf16.msra.mxu0 %v2041
        %2280 = vmatpush.bf16.msra.mxu0 %v2037
        %2281 = vmatpush.bf16.msra.mxu0 %v2033
        %2282 = vmatmul.bf16.gmra.mxu0 %v1350
        %v2283 = vpop.f32.mrf.mxu0
        %v2284 = vadd.f32 %v2270, %v2283
        %v2285 = vpop.f32.mrf.mxu0
        %v2286 = vadd.f32 %v2272, %v2285
        %2287 = vdwg.mxu0
        %2288 = vmatpush.bf16.msra.mxu0 %v1966
        %2289 = vmatpush.bf16.msra.mxu0 %v1962
        %2290 = vmatpush.bf16.msra.mxu0 %v1958
        %2291 = vmatpush.bf16.msra.mxu0 %v1954
        %2292 = vmatpush.bf16.msra.mxu0 %v1950
        %2293 = vmatpush.bf16.msra.mxu0 %v1946
        %2294 = vmatpush.bf16.msra.mxu0 %v1942
        %2295 = vmatpush.bf16.msra.mxu0 %v1938
        %2296 = vmatmul.bf16.gmra.mxu0 %v741
        %v2297 = vpop.f32.mrf.mxu0
        %v2298 = vadd.f32 %v1516, %v2297
        %v2299 = vpop.f32.mrf.mxu0
        %v2300 = vadd.f32 %v1518, %v2299
        %2301 = vdwg.mxu0
        %2302 = vmatpush.bf16.msra.mxu0 %v1998
        %2303 = vmatpush.bf16.msra.mxu0 %v1994
        %2304 = vmatpush.bf16.msra.mxu0 %v1990
        %2305 = vmatpush.bf16.msra.mxu0 %v1986
        %2306 = vmatpush.bf16.msra.mxu0 %v1982
        %2307 = vmatpush.bf16.msra.mxu0 %v1978
        %2308 = vmatpush.bf16.msra.mxu0 %v1974
        %2309 = vmatpush.bf16.msra.mxu0 %v1970
        %2310 = vmatmul.bf16.gmra.mxu0 %v742
        %v2311 = vpop.f32.mrf.mxu0
        %v2312 = vadd.f32 %v2298, %v2311
        %v2313 = vpop.f32.mrf.mxu0
        %v2314 = vadd.f32 %v2300, %v2313
        %2315 = vdwg.mxu0
        %2316 = vmatpush.bf16.msra.mxu0 %v2030
        %2317 = vmatpush.bf16.msra.mxu0 %v2026
        %2318 = vmatpush.bf16.msra.mxu0 %v2022
        %2319 = vmatpush.bf16.msra.mxu0 %v2018
        %2320 = vmatpush.bf16.msra.mxu0 %v2014
        %2321 = vmatpush.bf16.msra.mxu0 %v2010
        %2322 = vmatpush.bf16.msra.mxu0 %v2006
        %2323 = vmatpush.bf16.msra.mxu0 %v2002
        %2324 = vmatmul.bf16.gmra.mxu0 %v743
        %v2325 = vpop.f32.mrf.mxu0
        %v2326 = vadd.f32 %v2312, %v2325
        %v2327 = vpop.f32.mrf.mxu0
        %v2328 = vadd.f32 %v2314, %v2327
        %2329 = vdwg.mxu0
        %2330 = vmatpush.bf16.msra.mxu0 0
        %2331 = vmatpush.bf16.msra.mxu0 0
        %2332 = vmatpush.bf16.msra.mxu0 %v2054
        %2333 = vmatpush.bf16.msra.mxu0 %v2050
        %2334 = vmatpush.bf16.msra.mxu0 %v2046
        %2335 = vmatpush.bf16.msra.mxu0 %v2042
        %2336 = vmatpush.bf16.msra.mxu0 %v2038
        %2337 = vmatpush.bf16.msra.mxu0 %v2034
        %2338 = vmatmul.bf16.gmra.mxu0 %v1350
        %v2339 = vpop.f32.mrf.mxu0
        %v2340 = vadd.f32 %v2326, %v2339
        %v2341 = vpop.f32.mrf.mxu0
        %v2342 = vadd.f32 %v2328, %v2341
        %2343 = vdwg.mxu0
        %2344 = vmatpush.bf16.msra.mxu0 %v1967
        %2345 = vmatpush.bf16.msra.mxu0 %v1963
        %2346 = vmatpush.bf16.msra.mxu0 %v1959
        %2347 = vmatpush.bf16.msra.mxu0 %v1955
        %2348 = vmatpush.bf16.msra.mxu0 %v1951
        %2349 = vmatpush.bf16.msra.mxu0 %v1947
        %2350 = vmatpush.bf16.msra.mxu0 %v1943
        %2351 = vmatpush.bf16.msra.mxu0 %v1939
        %2352 = vmatmul.bf16.gmra.mxu0 %v741
        %v2353 = vpop.f32.mrf.mxu0
        %v2354 = vadd.f32 %v1572, %v2353
        %v2355 = vpop.f32.mrf.mxu0
        %v2356 = vadd.f32 %v1574, %v2355
        %2357 = vdwg.mxu0
        %2358 = vmatpush.bf16.msra.mxu0 %v1999
        %2359 = vmatpush.bf16.msra.mxu0 %v1995
        %2360 = vmatpush.bf16.msra.mxu0 %v1991
        %2361 = vmatpush.bf16.msra.mxu0 %v1987
        %2362 = vmatpush.bf16.msra.mxu0 %v1983
        %2363 = vmatpush.bf16.msra.mxu0 %v1979
        %2364 = vmatpush.bf16.msra.mxu0 %v1975
        %2365 = vmatpush.bf16.msra.mxu0 %v1971
        %2366 = vmatmul.bf16.gmra.mxu0 %v742
        %v2367 = vpop.f32.mrf.mxu0
        %v2368 = vadd.f32 %v2354, %v2367
        %v2369 = vpop.f32.mrf.mxu0
        %v2370 = vadd.f32 %v2356, %v2369
        %2371 = vdwg.mxu0
        %2372 = vmatpush.bf16.msra.mxu0 %v2031
        %2373 = vmatpush.bf16.msra.mxu0 %v2027
        %2374 = vmatpush.bf16.msra.mxu0 %v2023
        %2375 = vmatpush.bf16.msra.mxu0 %v2019
        %2376 = vmatpush.bf16.msra.mxu0 %v2015
        %2377 = vmatpush.bf16.msra.mxu0 %v2011
        %2378 = vmatpush.bf16.msra.mxu0 %v2007
        %2379 = vmatpush.bf16.msra.mxu0 %v2003
        %2380 = vmatmul.bf16.gmra.mxu0 %v743
        %v2381 = vpop.f32.mrf.mxu0
        %v2382 = vadd.f32 %v2368, %v2381
        %v2383 = vpop.f32.mrf.mxu0
        %v2384 = vadd.f32 %v2370, %v2383
        %2385 = vdwg.mxu0
        %2386 = vmatpush.bf16.msra.mxu0 0
        %2387 = vmatpush.bf16.msra.mxu0 0
        %2388 = vmatpush.bf16.msra.mxu0 %v2055
        %2389 = vmatpush.bf16.msra.mxu0 %v2051
        %2390 = vmatpush.bf16.msra.mxu0 %v2047
        %2391 = vmatpush.bf16.msra.mxu0 %v2043
        %2392 = vmatpush.bf16.msra.mxu0 %v2039
        %2393 = vmatpush.bf16.msra.mxu0 %v2035
        %2394 = vmatmul.bf16.gmra.mxu0 %v1350
        %v2395 = vpop.f32.mrf.mxu0
        %v2396 = vadd.f32 %v2382, %v2395
        %v2397 = vpop.f32.mrf.mxu0
        %v2398 = vadd.f32 %v2384, %v2397
        %2399 = vdwg.mxu0
        %v2401 = vsel %vm1348, %v488, 0
        %2403 = vmatpush.bf16.msra.mxu0 %v1964
        %2404 = vmatpush.bf16.msra.mxu0 %v1960
        %2405 = vmatpush.bf16.msra.mxu0 %v1956
        %2406 = vmatpush.bf16.msra.mxu0 %v1952
        %2407 = vmatpush.bf16.msra.mxu0 %v1948
        %2408 = vmatpush.bf16.msra.mxu0 %v1944
        %2409 = vmatpush.bf16.msra.mxu0 %v1940
        %2410 = vmatpush.bf16.msra.mxu0 %v1936
        %2411 = vmatmul.bf16.gmra.mxu0 %v485
        %v2412 = vpop.f32.mrf.mxu0
        %v2413 = vadd.f32 0.0, %v2412
        %v2414 = vpop.f32.mrf.mxu0
        %v2415 = vadd.f32 0.0, %v2414
        %2416 = vdwg.mxu0
        %2417 = vmatpush.bf16.msra.mxu0 %v1996
        %2418 = vmatpush.bf16.msra.mxu0 %v1992
        %2419 = vmatpush.bf16.msra.mxu0 %v1988
        %2420 = vmatpush.bf16.msra.mxu0 %v1984
        %2421 = vmatpush.bf16.msra.mxu0 %v1980
        %2422 = vmatpush.bf16.msra.mxu0 %v1976
        %2423 = vmatpush.bf16.msra.mxu0 %v1972
        %2424 = vmatpush.bf16.msra.mxu0 %v1968
        %2425 = vmatmul.bf16.gmra.mxu0 %v486
        %v2426 = vpop.f32.mrf.mxu0
        %v2427 = vadd.f32 %v2413, %v2426
        %v2428 = vpop.f32.mrf.mxu0
        %v2429 = vadd.f32 %v2415, %v2428
        %2430 = vdwg.mxu0
        %2431 = vmatpush.bf16.msra.mxu0 %v2028
        %2432 = vmatpush.bf16.msra.mxu0 %v2024
        %2433 = vmatpush.bf16.msra.mxu0 %v2020
        %2434 = vmatpush.bf16.msra.mxu0 %v2016
        %2435 = vmatpush.bf16.msra.mxu0 %v2012
        %2436 = vmatpush.bf16.msra.mxu0 %v2008
        %2437 = vmatpush.bf16.msra.mxu0 %v2004
        %2438 = vmatpush.bf16.msra.mxu0 %v2000
        %2439 = vmatmul.bf16.gmra.mxu0 %v487
        %v2440 = vpop.f32.mrf.mxu0
        %v2441 = vadd.f32 %v2427, %v2440
        %v2442 = vpop.f32.mrf.mxu0
        %v2443 = vadd.f32 %v2429, %v2442
        %2444 = vdwg.mxu0
        %2445 = vmatpush.bf16.msra.mxu0 0
        %2446 = vmatpush.bf16.msra.mxu0 0
        %2447 = vmatpush.bf16.msra.mxu0 %v2052
        %2448 = vmatpush.bf16.msra.mxu0 %v2048
        %2449 = vmatpush.bf16.msra.mxu0 %v2044
        %2450 = vmatpush.bf16.msra.mxu0 %v2040
        %2451 = vmatpush.bf16.msra.mxu0 %v2036
        %2452 = vmatpush.bf16.msra.mxu0 %v2032
        %2453 = vmatmul.bf16.gmra.mxu0 %v2401
        %v2454 = vpop.f32.mrf.mxu0
        %v2455 = vadd.f32 %v2441, %v2454
        %v2456 = vpop.f32.mrf.mxu0
        %v2457 = vadd.f32 %v2443, %v2456
        %2458 = vdwg.mxu0
        %2459 = vmatpush.bf16.msra.mxu0 %v1965
        %2460 = vmatpush.bf16.msra.mxu0 %v1961
        %2461 = vmatpush.bf16.msra.mxu0 %v1957
        %2462 = vmatpush.bf16.msra.mxu0 %v1953
        %2463 = vmatpush.bf16.msra.mxu0 %v1949
        %2464 = vmatpush.bf16.msra.mxu0 %v1945
        %2465 = vmatpush.bf16.msra.mxu0 %v1941
        %2466 = vmatpush.bf16.msra.mxu0 %v1937
        %2467 = vmatmul.bf16.gmra.mxu0 %v485
        %v2468 = vpop.f32.mrf.mxu0
        %v2469 = vadd.f32 0.0, %v2468
        %v2470 = vpop.f32.mrf.mxu0
        %v2471 = vadd.f32 0.0, %v2470
        %2472 = vdwg.mxu0
        %2473 = vmatpush.bf16.msra.mxu0 %v1997
        %2474 = vmatpush.bf16.msra.mxu0 %v1993
        %2475 = vmatpush.bf16.msra.mxu0 %v1989
        %2476 = vmatpush.bf16.msra.mxu0 %v1985
        %2477 = vmatpush.bf16.msra.mxu0 %v1981
        %2478 = vmatpush.bf16.msra.mxu0 %v1977
        %2479 = vmatpush.bf16.msra.mxu0 %v1973
        %2480 = vmatpush.bf16.msra.mxu0 %v1969
        %2481 = vmatmul.bf16.gmra.mxu0 %v486
        %v2482 = vpop.f32.mrf.mxu0
        %v2483 = vadd.f32 %v2469, %v2482
        %v2484 = vpop.f32.mrf.mxu0
        %v2485 = vadd.f32 %v2471, %v2484
        %2486 = vdwg.mxu0
        %2487 = vmatpush.bf16.msra.mxu0 %v2029
        %2488 = vmatpush.bf16.msra.mxu0 %v2025
        %2489 = vmatpush.bf16.msra.mxu0 %v2021
        %2490 = vmatpush.bf16.msra.mxu0 %v2017
        %2491 = vmatpush.bf16.msra.mxu0 %v2013
        %2492 = vmatpush.bf16.msra.mxu0 %v2009
        %2493 = vmatpush.bf16.msra.mxu0 %v2005
        %2494 = vmatpush.bf16.msra.mxu0 %v2001
        %2495 = vmatmul.bf16.gmra.mxu0 %v487
        %v2496 = vpop.f32.mrf.mxu0
        %v2497 = vadd.f32 %v2483, %v2496
        %v2498 = vpop.f32.mrf.mxu0
        %v2499 = vadd.f32 %v2485, %v2498
        %2500 = vdwg.mxu0
        %2501 = vmatpush.bf16.msra.mxu0 0
        %2502 = vmatpush.bf16.msra.mxu0 0
        %2503 = vmatpush.bf16.msra.mxu0 %v2053
        %2504 = vmatpush.bf16.msra.mxu0 %v2049
        %2505 = vmatpush.bf16.msra.mxu0 %v2045
        %2506 = vmatpush.bf16.msra.mxu0 %v2041
        %2507 = vmatpush.bf16.msra.mxu0 %v2037
        %2508 = vmatpush.bf16.msra.mxu0 %v2033
        %2509 = vmatmul.bf16.gmra.mxu0 %v2401
        %v2510 = vpop.f32.mrf.mxu0
        %v2511 = vadd.f32 %v2497, %v2510
        %v2512 = vpop.f32.mrf.mxu0
        %v2513 = vadd.f32 %v2499, %v2512
        %2514 = vdwg.mxu0
        %2515 = vmatpush.bf16.msra.mxu0 %v1966
        %2516 = vmatpush.bf16.msra.mxu0 %v1962
        %2517 = vmatpush.bf16.msra.mxu0 %v1958
        %2518 = vmatpush.bf16.msra.mxu0 %v1954
        %2519 = vmatpush.bf16.msra.mxu0 %v1950
        %2520 = vmatpush.bf16.msra.mxu0 %v1946
        %2521 = vmatpush.bf16.msra.mxu0 %v1942
        %2522 = vmatpush.bf16.msra.mxu0 %v1938
        %2523 = vmatmul.bf16.gmra.mxu0 %v485
        %v2524 = vpop.f32.mrf.mxu0
        %v2525 = vadd.f32 0.0, %v2524
        %v2526 = vpop.f32.mrf.mxu0
        %v2527 = vadd.f32 0.0, %v2526
        %2528 = vdwg.mxu0
        %2529 = vmatpush.bf16.msra.mxu0 %v1998
        %2530 = vmatpush.bf16.msra.mxu0 %v1994
        %2531 = vmatpush.bf16.msra.mxu0 %v1990
        %2532 = vmatpush.bf16.msra.mxu0 %v1986
        %2533 = vmatpush.bf16.msra.mxu0 %v1982
        %2534 = vmatpush.bf16.msra.mxu0 %v1978
        %2535 = vmatpush.bf16.msra.mxu0 %v1974
        %2536 = vmatpush.bf16.msra.mxu0 %v1970
        %2537 = vmatmul.bf16.gmra.mxu0 %v486
        %v2538 = vpop.f32.mrf.mxu0
        %v2539 = vadd.f32 %v2525, %v2538
        %v2540 = vpop.f32.mrf.mxu0
        %v2541 = vadd.f32 %v2527, %v2540
        %2542 = vdwg.mxu0
        %2543 = vmatpush.bf16.msra.mxu0 %v2030
        %2544 = vmatpush.bf16.msra.mxu0 %v2026
        %2545 = vmatpush.bf16.msra.mxu0 %v2022
        %2546 = vmatpush.bf16.msra.mxu0 %v2018
        %2547 = vmatpush.bf16.msra.mxu0 %v2014
        %2548 = vmatpush.bf16.msra.mxu0 %v2010
        %2549 = vmatpush.bf16.msra.mxu0 %v2006
        %2550 = vmatpush.bf16.msra.mxu0 %v2002
        %2551 = vmatmul.bf16.gmra.mxu0 %v487
        %v2552 = vpop.f32.mrf.mxu0
        %v2553 = vadd.f32 %v2539, %v2552
        %v2554 = vpop.f32.mrf.mxu0
        %v2555 = vadd.f32 %v2541, %v2554
        %2556 = vdwg.mxu0
        %2557 = vmatpush.bf16.msra.mxu0 0
        %2558 = vmatpush.bf16.msra.mxu0 0
        %2559 = vmatpush.bf16.msra.mxu0 %v2054
        %2560 = vmatpush.bf16.msra.mxu0 %v2050
        %2561 = vmatpush.bf16.msra.mxu0 %v2046
        %2562 = vmatpush.bf16.msra.mxu0 %v2042
        %2563 = vmatpush.bf16.msra.mxu0 %v2038
        %2564 = vmatpush.bf16.msra.mxu0 %v2034
        %2565 = vmatmul.bf16.gmra.mxu0 %v2401
        %v2566 = vpop.f32.mrf.mxu0
        %v2567 = vadd.f32 %v2553, %v2566
        %v2568 = vpop.f32.mrf.mxu0
        %v2569 = vadd.f32 %v2555, %v2568
        %2570 = vdwg.mxu0
        %2571 = vmatpush.bf16.msra.mxu0 %v1967
        %2572 = vmatpush.bf16.msra.mxu0 %v1963
        %2573 = vmatpush.bf16.msra.mxu0 %v1959
        %2574 = vmatpush.bf16.msra.mxu0 %v1955
        %2575 = vmatpush.bf16.msra.mxu0 %v1951
        %2576 = vmatpush.bf16.msra.mxu0 %v1947
        %2577 = vmatpush.bf16.msra.mxu0 %v1943
        %2578 = vmatpush.bf16.msra.mxu0 %v1939
        %2579 = vmatmul.bf16.gmra.mxu0 %v485
        %v2580 = vpop.f32.mrf.mxu0
        %v2581 = vadd.f32 0.0, %v2580
        %v2582 = vpop.f32.mrf.mxu0
        %v2583 = vadd.f32 0.0, %v2582
        %2584 = vdwg.mxu0
        %2585 = vmatpush.bf16.msra.mxu0 %v1999
        %2586 = vmatpush.bf16.msra.mxu0 %v1995
        %2587 = vmatpush.bf16.msra.mxu0 %v1991
        %2588 = vmatpush.bf16.msra.mxu0 %v1987
        %2589 = vmatpush.bf16.msra.mxu0 %v1983
        %2590 = vmatpush.bf16.msra.mxu0 %v1979
        %2591 = vmatpush.bf16.msra.mxu0 %v1975
        %2592 = vmatpush.bf16.msra.mxu0 %v1971
        %2593 = vmatmul.bf16.gmra.mxu0 %v486
        %v2594 = vpop.f32.mrf.mxu0
        %v2595 = vadd.f32 %v2581, %v2594
        %v2596 = vpop.f32.mrf.mxu0
        %v2597 = vadd.f32 %v2583, %v2596
        %2598 = vdwg.mxu0
        %2599 = vmatpush.bf16.msra.mxu0 %v2031
        %2600 = vmatpush.bf16.msra.mxu0 %v2027
        %2601 = vmatpush.bf16.msra.mxu0 %v2023
        %2602 = vmatpush.bf16.msra.mxu0 %v2019
        %2603 = vmatpush.bf16.msra.mxu0 %v2015
        %2604 = vmatpush.bf16.msra.mxu0 %v2011
        %2605 = vmatpush.bf16.msra.mxu0 %v2007
        %2606 = vmatpush.bf16.msra.mxu0 %v2003
        %2607 = vmatmul.bf16.gmra.mxu0 %v487
        %v2608 = vpop.f32.mrf.mxu0
        %v2609 = vadd.f32 %v2595, %v2608
        %v2610 = vpop.f32.mrf.mxu0
        %v2611 = vadd.f32 %v2597, %v2610
        %2612 = vdwg.mxu0
        %2613 = vmatpush.bf16.msra.mxu0 0
        %2614 = vmatpush.bf16.msra.mxu0 0
        %2615 = vmatpush.bf16.msra.mxu0 %v2055
        %2616 = vmatpush.bf16.msra.mxu0 %v2051
        %2617 = vmatpush.bf16.msra.mxu0 %v2047
        %2618 = vmatpush.bf16.msra.mxu0 %v2043
        %2619 = vmatpush.bf16.msra.mxu0 %v2039
        %2620 = vmatpush.bf16.msra.mxu0 %v2035
        %2621 = vmatmul.bf16.gmra.mxu0 %v2401
        %v2622 = vpop.f32.mrf.mxu0
        %v2623 = vadd.f32 %v2609, %v2622
        %v2624 = vpop.f32.mrf.mxu0
        %v2625 = vadd.f32 %v2611, %v2624
        %2626 = vdwg.mxu0
        %v2627 = vadd.f32 %v2228, %v2455
        %v2628 = vadd.f32 %v2284, %v2511
        %v2629 = vadd.f32 %v2340, %v2567
        %v2630 = vadd.f32 %v2396, %v2623
        %v2631 = vadd.f32 %v2230, %v2457
        %v2632 = vadd.f32 %v2286, %v2513
        %v2633 = vadd.f32 %v2342, %v2569
        %v2634 = vadd.f32 %v2398, %v2625
        %v2635 = vmul.f32 %v2627, %v2627
        %v2636 = vmul.f32 %v2628, %v2628
        %v2637 = vmul.f32 %v2631, %v2631
        %v2638 = vmul.f32 %v2632, %v2632
        %v2639 = vmul.f32 %v2629, %v2629
        %v2640 = vmul.f32 %v2630, %v2630
        %v2641 = vmul.f32 %v2633, %v2633
        %v2642 = vmul.f32 %v2634, %v2634
        %v2643 = vadd.f32 %v2635, %v2639
        %v2644 = vadd.f32 %v2636, %v2640
        %v2645 = vadd.f32 %v2637, %v2641
        %v2646 = vadd.f32 %v2638, %v2642
        %v2647 = vpack.c.bf16 %v2644, %v2643
        %v2648 = vpack.c.bf16 %v2646, %v2645
        %v2649 = vunpack.c.l.bf16 %v2647
        %v2650 = vunpack.c.h.bf16 %v2647
        %v2651 = vunpack.c.l.bf16 %v2648
        %v2652 = vunpack.c.h.bf16 %v2648
        %v2653 = vsub.f32 %v2643, %v2649
        %v2654 = vsub.f32 %v2644, %v2650
        %v2655 = vsub.f32 %v2645, %v2651
        %v2656 = vsub.f32 %v2646, %v2652
        %v2657 = vpack.c.bf16 %v2655, %v2653
        %v2658 = vpack.c.bf16 %v2656, %v2654
        %v2659 = vld [vmem:[%s4] sm:$0xff]
        %v2660 = vld [vmem:[%s4 + $0x8] sm:$0xff]
        %v2661 = vld [vmem:[%s4 + $0x10] sm:$0xff]
        %v2662 = vld [vmem:[%s4 + $0x18] sm:$0xff]
        %v2663 = vld [vmem:[%s4 + $0x20] sm:$0xff]
        %v2664 = vld [vmem:[%s4 + $0x28] sm:$0xff]
        %v2665 = vld [vmem:[%s4 + $0x30] sm:$0xff]
        %v2666 = vld [vmem:[%s4 + $0x38] sm:$0xff]
        %v2667 = vld [vmem:[%s4 + $0x40] sm:$0xff]
        %v2668 = vld [vmem:[%s4 + $0x48] sm:$0xff]
        %v2669 = vld [vmem:[%s4 + $0x50] sm:$0xff]
        %v2670 = vld [vmem:[%s4 + $0x58] sm:$0xff]
        %v2671 = vld [vmem:[%s4 + $0x60] sm:$0xff]
        %v2672 = vld [vmem:[%s4 + $0x68] sm:$0xff]
        %v2673 = vld [vmem:[%s4 + $0x70] sm:$0xff]
        %v2674 = vld [vmem:[%s4 + $0x78] sm:$0xff]
        %v2675 = vld [vmem:[%s4 + $0x80] sm:$0xff]
        %v2676 = vld [vmem:[%s4 + $0x88] sm:$0xff]
        %v2677 = vld [vmem:[%s4 + $0x90] sm:$0xff]
        %v2678 = vld [vmem:[%s4 + $0x98] sm:$0xff]
        %v2679 = vld [vmem:[%s4 + $0xa0] sm:$0xff]
        %v2680 = vld [vmem:[%s4 + $0xa8] sm:$0xff]
        %v2681 = vld [vmem:[%s4 + $0xb0] sm:$0xff]
        %v2682 = vld [vmem:[%s4 + $0xb8] sm:$0xff]
        %v2683 = vld [vmem:[%s4 + $0xc0] sm:$0xff]
        %v2684 = vld [vmem:[%s4 + $0xc8] sm:$0xff]
        %v2685 = vld [vmem:[%s4 + $0xd0] sm:$0xff]
        %v2686 = vld [vmem:[%s4 + $0xd8] sm:$0xff]
        %v2687 = vld [vmem:[%s4 + $0xe0] sm:$0xff]
        %v2688 = vld [vmem:[%s4 + $0xe8] sm:$0xff]
        %v2689 = vld [vmem:[%s4 + $0xf0] sm:$0xff]
        %v2690 = vld [vmem:[%s4 + $0xf8] sm:$0xff]
        %v2693 = vunpack.c.l.b16 %v2647
        %v2694 = vunpack.c.h.b16 %v2647
        %v2695 = vunpack.c.l.b16 %v2648
        %v2696 = vunpack.c.h.b16 %v2648
        %v2697 = vpack.c.b16 %v2695, %v2693
        %v2698 = vpack.c.b16 %v2696, %v2694
        %v2733 = vunpack.c.l.b16 %v2659
        %v2734 = vunpack.c.h.b16 %v2659
        %v2735 = vunpack.c.l.b16 %v2660
        %v2736 = vunpack.c.h.b16 %v2660
        %v2737 = vunpack.c.l.b16 %v2661
        %v2738 = vunpack.c.h.b16 %v2661
        %v2739 = vunpack.c.l.b16 %v2662
        %v2740 = vunpack.c.h.b16 %v2662
        %v2741 = vunpack.c.l.b16 %v2663
        %v2742 = vunpack.c.h.b16 %v2663
        %v2743 = vunpack.c.l.b16 %v2664
        %v2744 = vunpack.c.h.b16 %v2664
        %v2745 = vunpack.c.l.b16 %v2665
        %v2746 = vunpack.c.h.b16 %v2665
        %v2747 = vunpack.c.l.b16 %v2666
        %v2748 = vunpack.c.h.b16 %v2666
        %v2749 = vunpack.c.l.b16 %v2667
        %v2750 = vunpack.c.h.b16 %v2667
        %v2751 = vunpack.c.l.b16 %v2668
        %v2752 = vunpack.c.h.b16 %v2668
        %v2753 = vunpack.c.l.b16 %v2669
        %v2754 = vunpack.c.h.b16 %v2669
        %v2755 = vunpack.c.l.b16 %v2670
        %v2756 = vunpack.c.h.b16 %v2670
        %v2757 = vunpack.c.l.b16 %v2671
        %v2758 = vunpack.c.h.b16 %v2671
        %v2759 = vunpack.c.l.b16 %v2672
        %v2760 = vunpack.c.h.b16 %v2672
        %v2761 = vunpack.c.l.b16 %v2673
        %v2762 = vunpack.c.h.b16 %v2673
        %v2763 = vunpack.c.l.b16 %v2674
        %v2764 = vunpack.c.h.b16 %v2674
        %v2765 = vunpack.c.l.b16 %v2675
        %v2766 = vunpack.c.h.b16 %v2675
        %v2767 = vunpack.c.l.b16 %v2676
        %v2768 = vunpack.c.h.b16 %v2676
        %v2769 = vunpack.c.l.b16 %v2677
        %v2770 = vunpack.c.h.b16 %v2677
        %v2771 = vunpack.c.l.b16 %v2678
        %v2772 = vunpack.c.h.b16 %v2678
        %v2773 = vunpack.c.l.b16 %v2679
        %v2774 = vunpack.c.h.b16 %v2679
        %v2775 = vunpack.c.l.b16 %v2680
        %v2776 = vunpack.c.h.b16 %v2680
        %v2777 = vunpack.c.l.b16 %v2681
        %v2778 = vunpack.c.h.b16 %v2681
        %v2779 = vunpack.c.l.b16 %v2682
        %v2780 = vunpack.c.h.b16 %v2682
        %v2781 = vunpack.c.l.b16 %v2683
        %v2782 = vunpack.c.h.b16 %v2683
        %v2783 = vunpack.c.l.b16 %v2684
        %v2784 = vunpack.c.h.b16 %v2684
        %v2785 = vunpack.c.l.b16 %v2685
        %v2786 = vunpack.c.h.b16 %v2685
        %v2787 = vunpack.c.l.b16 %v2686
        %v2788 = vunpack.c.h.b16 %v2686
        %v2789 = vunpack.c.l.b16 %v2687
        %v2790 = vunpack.c.h.b16 %v2687
        %v2791 = vunpack.c.l.b16 %v2688
        %v2792 = vunpack.c.h.b16 %v2688
        %v2793 = vunpack.c.l.b16 %v2689
        %v2794 = vunpack.c.h.b16 %v2689
        %v2795 = vunpack.c.l.b16 %v2690
        %v2796 = vunpack.c.h.b16 %v2690
        %v2797 = vpack.c.b16 %v2735, %v2733
        %v2798 = vpack.c.b16 %v2736, %v2734
        %v2799 = vpack.c.b16 %v2739, %v2737
        %v2800 = vpack.c.b16 %v2740, %v2738
        %v2801 = vpack.c.b16 %v2743, %v2741
        %v2802 = vpack.c.b16 %v2744, %v2742
        %v2803 = vpack.c.b16 %v2747, %v2745
        %v2804 = vpack.c.b16 %v2748, %v2746
        %v2805 = vpack.c.b16 %v2751, %v2749
        %v2806 = vpack.c.b16 %v2752, %v2750
        %v2807 = vpack.c.b16 %v2755, %v2753
        %v2808 = vpack.c.b16 %v2756, %v2754
        %v2809 = vpack.c.b16 %v2759, %v2757
        %v2810 = vpack.c.b16 %v2760, %v2758
        %v2811 = vpack.c.b16 %v2763, %v2761
        %v2812 = vpack.c.b16 %v2764, %v2762
        %v2813 = vpack.c.b16 %v2767, %v2765
        %v2814 = vpack.c.b16 %v2768, %v2766
        %v2815 = vpack.c.b16 %v2771, %v2769
        %v2816 = vpack.c.b16 %v2772, %v2770
        %v2817 = vpack.c.b16 %v2775, %v2773
        %v2818 = vpack.c.b16 %v2776, %v2774
        %v2819 = vpack.c.b16 %v2779, %v2777
        %v2820 = vpack.c.b16 %v2780, %v2778
        %v2821 = vpack.c.b16 %v2783, %v2781
        %v2822 = vpack.c.b16 %v2784, %v2782
        %v2823 = vpack.c.b16 %v2787, %v2785
        %v2824 = vpack.c.b16 %v2788, %v2786
        %v2825 = vpack.c.b16 %v2791, %v2789
        %v2826 = vpack.c.b16 %v2792, %v2790
        %v2827 = vpack.c.b16 %v2795, %v2793
        %v2828 = vpack.c.b16 %v2796, %v2794
        %2861 = vmatpush.bf16.msra.mxu0 %v2811
        %2862 = vmatpush.bf16.msra.mxu0 %v2809
        %2863 = vmatpush.bf16.msra.mxu0 %v2807
        %2864 = vmatpush.bf16.msra.mxu0 %v2805
        %2865 = vmatpush.bf16.msra.mxu0 %v2803
        %2866 = vmatpush.bf16.msra.mxu0 %v2801
        %2867 = vmatpush.bf16.msra.mxu0 %v2799
        %2868 = vmatpush.bf16.msra.mxu0 %v2797
        %2869 = vmatmul.bf16.gmra.mxu0 %v2697
        %v2870 = vpop.f32.mrf.mxu0
        %v2871 = vadd.f32 0.0, %v2870
        %v2872 = vpop.f32.mrf.mxu0
        %v2873 = vadd.f32 0.0, %v2872
        %2874 = vdwg.mxu0
        %2875 = vmatpush.bf16.msra.mxu0 %v2827
        %2876 = vmatpush.bf16.msra.mxu0 %v2825
        %2877 = vmatpush.bf16.msra.mxu0 %v2823
        %2878 = vmatpush.bf16.msra.mxu0 %v2821
        %2879 = vmatpush.bf16.msra.mxu0 %v2819
        %2880 = vmatpush.bf16.msra.mxu0 %v2817
        %2881 = vmatpush.bf16.msra.mxu0 %v2815
        %2882 = vmatpush.bf16.msra.mxu0 %v2813
        %2883 = vmatmul.bf16.gmra.mxu0 %v2698
        %v2884 = vpop.f32.mrf.mxu0
        %v2885 = vadd.f32 %v2871, %v2884
        %v2886 = vpop.f32.mrf.mxu0
        %v2887 = vadd.f32 %v2873, %v2886
        %2888 = vdwg.mxu0
        %2889 = vmatpush.bf16.msra.mxu0 %v2812
        %2890 = vmatpush.bf16.msra.mxu0 %v2810
        %2891 = vmatpush.bf16.msra.mxu0 %v2808
        %2892 = vmatpush.bf16.msra.mxu0 %v2806
        %2893 = vmatpush.bf16.msra.mxu0 %v2804
        %2894 = vmatpush.bf16.msra.mxu0 %v2802
        %2895 = vmatpush.bf16.msra.mxu0 %v2800
        %2896 = vmatpush.bf16.msra.mxu0 %v2798
        %2897 = vmatmul.bf16.gmra.mxu0 %v2697
        %v2898 = vpop.f32.mrf.mxu0
        %v2899 = vadd.f32 0.0, %v2898
        %v2900 = vpop.f32.mrf.mxu0
        %v2901 = vadd.f32 0.0, %v2900
        %2902 = vdwg.mxu0
        %2903 = vmatpush.bf16.msra.mxu0 %v2828
        %2904 = vmatpush.bf16.msra.mxu0 %v2826
        %2905 = vmatpush.bf16.msra.mxu0 %v2824
        %2906 = vmatpush.bf16.msra.mxu0 %v2822
        %2907 = vmatpush.bf16.msra.mxu0 %v2820
        %2908 = vmatpush.bf16.msra.mxu0 %v2818
        %2909 = vmatpush.bf16.msra.mxu0 %v2816
        %2910 = vmatpush.bf16.msra.mxu0 %v2814
        %2911 = vmatmul.bf16.gmra.mxu0 %v2698
        %v2912 = vpop.f32.mrf.mxu0
        %v2913 = vadd.f32 %v2899, %v2912
        %v2914 = vpop.f32.mrf.mxu0
        %v2915 = vadd.f32 %v2901, %v2914
        %2916 = vdwg.mxu0
        %v2917 = vadd.f32 %v2885, %v2913
        %v2918 = vadd.f32 %v2887, %v2915
        %v2919 = vld [vmem:[%s4] sm:$0xf]
        %v2920 = vld [vmem:[%s4 + $0x8] sm:$0xf]
        %v2921 = vld [vmem:[%s4 + $0x10] sm:$0xf]
        %v2922 = vld [vmem:[%s4 + $0x18] sm:$0xf]
        %v2923 = vld [vmem:[%s4 + $0x20] sm:$0xf]
        %v2924 = vld [vmem:[%s4 + $0x28] sm:$0xf]
        %v2925 = vld [vmem:[%s4 + $0x30] sm:$0xf]
        %v2926 = vld [vmem:[%s4 + $0x38] sm:$0xf]
        %v2927 = vld [vmem:[%s4 + $0x40] sm:$0xf]
        %v2928 = vld [vmem:[%s4 + $0x48] sm:$0xf]
        %v2929 = vld [vmem:[%s4 + $0x50] sm:$0xf]
        %v2930 = vld [vmem:[%s4 + $0x58] sm:$0xf]
        %v2931 = vld [vmem:[%s4 + $0x60] sm:$0xf]
        %v2932 = vld [vmem:[%s4 + $0x68] sm:$0xf]
        %v2933 = vld [vmem:[%s4 + $0x70] sm:$0xf]
        %v2934 = vld [vmem:[%s4 + $0x78] sm:$0xf]
        %v2935 = vld [vmem:[%s4 + $0x80] sm:$0xf]
        %v2936 = vld [vmem:[%s4 + $0x88] sm:$0xf]
        %v2937 = vld [vmem:[%s4 + $0x90] sm:$0xf]
        %v2938 = vld [vmem:[%s4 + $0x98] sm:$0xf]
        %v2939 = vld [vmem:[%s4 + $0xa0] sm:$0xf]
        %v2940 = vld [vmem:[%s4 + $0xa8] sm:$0xf]
        %v2941 = vld [vmem:[%s4 + $0xb0] sm:$0xf]
        %v2942 = vld [vmem:[%s4 + $0xb8] sm:$0xf]
        %v2943 = vld [vmem:[%s4 + $0xc0] sm:$0xf]
        %v2944 = vld [vmem:[%s4 + $0xc8] sm:$0xf]
        %v2945 = vld [vmem:[%s4 + $0xd0] sm:$0xf]
        %v2946 = vld [vmem:[%s4 + $0xd8] sm:$0xf]
        %v2947 = vld [vmem:[%s4 + $0xe0] sm:$0xf]
        %v2948 = vld [vmem:[%s4 + $0xe8] sm:$0xf]
        %v2949 = vld [vmem:[%s4 + $0xf0] sm:$0xf]
        %v2950 = vld [vmem:[%s4 + $0xf8] sm:$0xf]
        %v2983 = vunpack.c.l.b16 %v2919
        %v2984 = vunpack.c.l.b16 %v2920
        %v2985 = vunpack.c.l.b16 %v2921
        %v2986 = vunpack.c.l.b16 %v2922
        %v2987 = vunpack.c.l.b16 %v2923
        %v2988 = vunpack.c.l.b16 %v2924
        %v2989 = vunpack.c.l.b16 %v2925
        %v2990 = vunpack.c.l.b16 %v2926
        %v2991 = vunpack.c.l.b16 %v2927
        %v2992 = vunpack.c.l.b16 %v2928
        %v2993 = vunpack.c.l.b16 %v2929
        %v2994 = vunpack.c.l.b16 %v2930
        %v2995 = vunpack.c.l.b16 %v2931
        %v2996 = vunpack.c.l.b16 %v2932
        %v2997 = vunpack.c.l.b16 %v2933
        %v2998 = vunpack.c.l.b16 %v2934
        %v2999 = vunpack.c.l.b16 %v2935
        %v3000 = vunpack.c.l.b16 %v2936
        %v3001 = vunpack.c.l.b16 %v2937
        %v3002 = vunpack.c.l.b16 %v2938
        %v3003 = vunpack.c.l.b16 %v2939
        %v3004 = vunpack.c.l.b16 %v2940
        %v3005 = vunpack.c.l.b16 %v2941
        %v3006 = vunpack.c.l.b16 %v2942
        %v3007 = vunpack.c.l.b16 %v2943
        %v3008 = vunpack.c.l.b16 %v2944
        %v3009 = vunpack.c.l.b16 %v2945
        %v3010 = vunpack.c.l.b16 %v2946
        %v3011 = vunpack.c.l.b16 %v2947
        %v3012 = vunpack.c.l.b16 %v2948
        %v3013 = vunpack.c.l.b16 %v2949
        %v3014 = vunpack.c.l.b16 %v2950
        %v3015 = vpack.c.b16 %v2984, %v2983
        %v3016 = vpack.c.b16 %v2986, %v2985
        %v3017 = vpack.c.b16 %v2988, %v2987
        %v3018 = vpack.c.b16 %v2990, %v2989
        %v3019 = vpack.c.b16 %v2992, %v2991
        %v3020 = vpack.c.b16 %v2994, %v2993
        %v3021 = vpack.c.b16 %v2996, %v2995
        %v3022 = vpack.c.b16 %v2998, %v2997
        %v3023 = vpack.c.b16 %v3000, %v2999
        %v3024 = vpack.c.b16 %v3002, %v3001
        %v3025 = vpack.c.b16 %v3004, %v3003
        %v3026 = vpack.c.b16 %v3006, %v3005
        %v3027 = vpack.c.b16 %v3008, %v3007
        %v3028 = vpack.c.b16 %v3010, %v3009
        %v3029 = vpack.c.b16 %v3012, %v3011
        %v3030 = vpack.c.b16 %v3014, %v3013
        %3047 = vmatpush.bf16.msra.mxu0 %v3022
        %3048 = vmatpush.bf16.msra.mxu0 %v3021
        %3049 = vmatpush.bf16.msra.mxu0 %v3020
        %3050 = vmatpush.bf16.msra.mxu0 %v3019
        %3051 = vmatpush.bf16.msra.mxu0 %v3018
        %3052 = vmatpush.bf16.msra.mxu0 %v3017
        %3053 = vmatpush.bf16.msra.mxu0 %v3016
        %3054 = vmatpush.bf16.msra.mxu0 %v3015
        %3055 = vmatmul.bf16.gmra.mxu0 %v2657
        %v3056 = vpop.f32.mrf.mxu0
        %v3057 = vadd.f32 0.0, %v3056
        %v3058 = vpop.f32.mrf.mxu0
        %v3059 = vadd.f32 0.0, %v3058
        %3060 = vdwg.mxu0
        %3061 = vmatpush.bf16.msra.mxu0 %v3030
        %3062 = vmatpush.bf16.msra.mxu0 %v3029
        %3063 = vmatpush.bf16.msra.mxu0 %v3028
        %3064 = vmatpush.bf16.msra.mxu0 %v3027
        %3065 = vmatpush.bf16.msra.mxu0 %v3026
        %3066 = vmatpush.bf16.msra.mxu0 %v3025
        %3067 = vmatpush.bf16.msra.mxu0 %v3024
        %3068 = vmatpush.bf16.msra.mxu0 %v3023
        %3069 = vmatmul.bf16.gmra.mxu0 %v2658
        %v3070 = vpop.f32.mrf.mxu0
        %v3071 = vadd.f32 %v3057, %v3070
        %v3072 = vpop.f32.mrf.mxu0
        %v3073 = vadd.f32 %v3059, %v3072
        %3074 = vdwg.mxu0
        %v3075 = vadd.f32 %v2917, %v3071
        %v3076 = vadd.f32 %v2918, %v3073
        %v3077 = vadd.f32 %v3075, 1e-06
        %v3078 = vadd.f32 %v3076, 1e-06
        %v3079 = vlog2.pop %v3077
        %v3080 = vmul.f32 %v3079, 0.6931472
        %v3081 = vlog2.pop %v3078
        %v3082 = vmul.f32 %v3081, 0.6931472
        %v3083 = vmul.f32 %v3080, 0.4342945
        %v3084 = vmul.f32 %v3082, 0.4342945
        %3085 = vst [vmem:[%s372] sm:$0xff] %v3083
        %3086 = vst [vmem:[%s372 + $0x8] sm:$0xff] %v3084
        %s3087 = smul.u32 2, %s23
        %p3088 = scmp.lt.s32.totalorder %s22, 1
        %s3089 = scalar_select %p3088, %s22, 1
        %p3090 = scmp.lt.s32.totalorder %s3087, 1
        %s3091 = scalar_select %p3090, %s3087, 1
        %s3092 = smul.addr %s3089, 2
        %s3093 = sadd.s32 %s3091, %s3092
        %s3094 = smul.addr %s3093, 8
        %s3095 = scalar_lea.vmem %s5, %s3094
        // Predicated region
        $region49: #{logmel.1} parent=39 // pred_check
          %p3096 = pneg %p173
        $region50: #{logmel.1} parent=39 // pred_check_branch
          %3098 = sbr.rel (%p3096) target = $region52
        $region51: #{logmel.1} parent=39 // pred_region
          %s3099 = smul.u32 2, %s23
        $region52: #{logmel.1} parent=39 // pred_fallthru
          _
      $region40: #{logmel.1} parent=5 // pred_fallthru
        _
      %p3100 = scmp.le.s32.totalorder 2, %s13
      // Predicated region
      $region53: #{logmel.1} parent=5 // pred_check
        %p3101 = pneg %p3100
      $region54: #{logmel.1} parent=5 // pred_check_branch
        %3103 = sbr.rel (%p3101) target = $region56
      $region55: #{logmel.1} parent=5 // pred_region
        %s3104 = ssub.s32 %s13, 2
        // Predicated region
        $region57: #{logmel.1} parent=55 // pred_check
          %p3105 = pneg %p179
        $region58: #{logmel.1} parent=55 // pred_check_branch
          %3107 = sbr.rel (%p3105) target = $region60
        $region59: #{logmel.1} parent=55 // pred_region
          %s3108 = smul.u32 2, %s25
          %p3109 = scmp.lt.s32.totalorder %s24, 1
          %s3110 = scalar_select %p3109, %s24, 1
          %p3111 = scmp.lt.s32.totalorder %s3108, 1
          %s3112 = scalar_select %p3111, %s3108, 1
          %s3113 = smul.addr %s3110, 2
          %s3114 = sadd.s32 %s3112, %s3113
          %s3115 = smul.addr %s3114, 8
          %s3116 = scalar_lea.vmem %s5, %s3115
        $region60: #{logmel.1} parent=55 // pred_fallthru
          _
      $region56: #{logmel.1} parent=5 // pred_fallthru
        _
    $region6: #{logmel.1} parent=1 // loop_footer
      %s17 = sadd.s32 1, %s13
    $region7: #{logmel.1} parent=1 // loop_footer_branch
      %12 = sbr.rel target = $region3
    $region8: #{logmel.1} parent=1 // loop_exit
      _
    %3117 = vsyncpa [#allocation4], 1
    %s3118 = scalar_lea.sflag [#allocation4], 1
    %3119 = vsyncpa %s3118, 1
    %3120 = vsyncpa [#allocation6], 1

</llo_original>
